<compile_context>
chip_gen: v7x
topology: tpu7x:2x2x1
jax: 0.10.0
libtpu: 0.0.40
codegen_flags: <defaults>
</compile_context>

<pallas_src>
import functools

import jax
import jax.numpy as jnp
from jax import lax
from jax.experimental import pallas as pl
from jax.experimental.pallas import tpu as pltpu


def _lstm_gate_combine(gates, c, hidden_dim):
    """gates: [B, 4H] pre-activations (i|f|g|o), c: [B, H] -> (h_new, c_new)."""
    H = hidden_dim
    s = jax.nn.sigmoid(gates)              # one EUP pass over the whole 4H vreg
    i = s[:, 0 * H:1 * H]
    f = s[:, 1 * H:2 * H]
    o = s[:, 3 * H:4 * H]
    g = jnp.tanh(gates[:, 2 * H:3 * H])
    c_new = f * c + i * g
    h_new = o * jnp.tanh(c_new)
    return h_new, c_new


def pvad_lstm_kernel(x_ref, emb_ref,
                     w_se_ref, b_se_ref,
                     w_ih1_ref, b1_ref,
                     w_big_ref, b2_ref,
                     out_ref,
                     gih_s, h12_s, c1_s, c2_s,
                     *, hidden_dim):
    Tt, Bb, D = x_ref.shape                # time-chunk, batch-block, feature
    H = hidden_dim
    H4 = 4 * H

    # ---- init carried LSTM state at the first time chunk of this batch block
    @pl.when(pl.program_id(1) == 0)
    def _():
        h12_s[...] = jnp.zeros((Bb, 2 * H), jnp.float32)
        c1_s[...] = jnp.zeros((Bb, H), jnp.float32)
        c2_s[...] = jnp.zeros((Bb, H), jnp.float32)

    # ---- speaker-embedding projection (tiny; recomputed per chunk) ---------
    spk = jnp.dot(emb_ref[...], w_se_ref[...],
                  preferred_element_type=jnp.float32) + b_se_ref[...]   # [Bb, D]

    # ---- hoisted layer-1 input projection for the whole chunk --------------
    # one MXU-friendly [Tt*Bb, D] @ [D, 4H] matmul instead of Tt tiny ones
    xb = x_ref[...] + spk[None]                                         # [Tt,Bb,D]
    gih = (jnp.dot(xb.reshape(Tt * Bb, D), w_ih1_ref[...],
                   preferred_element_type=jnp.float32) + b1_ref[...])
    gih_s[...] = gih.reshape(Tt, Bb, H4)

    # loop-invariant weights; hoist the bias broadcast out of the loop
    w_big = w_big_ref[...]                                              # [2H, 8H]
    b2 = jnp.broadcast_to(b2_ref[...], (Bb, H4))

    # ---- prologue: layer-1 for local step 0 ---------------------------------
    # big matmul: lower 4H columns == h1_prev @ W_hh1 (h2 rows hit the 0 block)
    gf = jnp.dot(h12_s[...], w_big, preferred_element_type=jnp.float32)
    g1 = gih_s[0] + gf[:, :H4]
    h1n, c1n = _lstm_gate_combine(g1, c1_s[...], H)
    h12_s[:, :H] = h1n
    c1_s[...] = c1n

    # ---- skewed loop: one fused matmul per serial step ----------------------
    # operand is [h1_t | h2_{t-1}]; result lower half feeds layer-1 of step
    # t+1, upper half feeds layer-2 of step t; both gate-combines then
    # co-schedule on EUP/VALU.
    @pl.loop(0, Tt - 1)
    def _(t):
        gf = jnp.dot(h12_s[...], w_big, preferred_element_type=jnp.float32)
        g2 = gf[:, H4:] + b2
        g1 = gih_s[t + 1] + gf[:, :H4]
        h2n, c2n = _lstm_gate_combine(g2, c2_s[...], H)
        h1n, c1n = _lstm_gate_combine(g1, c1_s[...], H)
        out_ref[t] = h2n                    # write h2 directly; no h_all scratch
        h12_s[:, H:] = h2n
        c2_s[...] = c2n
        h12_s[:, :H] = h1n
        c1_s[...] = c1n

    # ---- epilogue: layer-2 for the last local step --------------------------
    gf = jnp.dot(h12_s[...], w_big, preferred_element_type=jnp.float32)
    g2 = gf[:, H4:] + b2
    h2n, c2n = _lstm_gate_combine(g2, c2_s[...], H)
    out_ref[Tt - 1] = h2n
    h12_s[:, H:] = h2n
    c2_s[...] = c2n


def init_params(key, input_dim, hidden_dim, embedding_dim, out_dim=3):
    """Deterministic synthetic parameters (stored pre-transposed for matmuls)."""
    ks = jax.random.split(key, 10)
    s = 0.1
    return {
        "w_se": jax.random.normal(ks[0], (embedding_dim, input_dim), jnp.float32) * s,
        "b_se": jax.random.normal(ks[1], (1, input_dim), jnp.float32) * s,
        "w_ih1": jax.random.normal(ks[2], (input_dim, 4 * hidden_dim), jnp.float32) * s,
        "w_hh1": jax.random.normal(ks[3], (hidden_dim, 4 * hidden_dim), jnp.float32) * s,
        "b1": jax.random.normal(ks[4], (1, 4 * hidden_dim), jnp.float32) * s,
        "w_ih2": jax.random.normal(ks[5], (hidden_dim, 4 * hidden_dim), jnp.float32) * s,
        "w_hh2": jax.random.normal(ks[6], (hidden_dim, 4 * hidden_dim), jnp.float32) * s,
        "b2": jax.random.normal(ks[7], (1, 4 * hidden_dim), jnp.float32) * s,
        "w_fc": jax.random.normal(ks[8], (hidden_dim, out_dim), jnp.float32) * s,
        "b_fc": jax.random.normal(ks[9], (1, out_dim), jnp.float32) * s,
    }


def pvad1et2_forward(x, speaker_embeddings, lengths, params, hidden_dim,
                     time_block=None):
    """x: [B, T, input_dim], speaker_embeddings: [B, embedding_dim],
    lengths: [B] int with max(lengths) == T.  Returns ([B, T, 3], lengths)."""
    B, T, D = x.shape
    E = speaker_embeddings.shape[-1]
    H = hidden_dim

    # batch block: multiple of 8 sublanes, up to 64 rows (amortizes the fixed
    # per-step MXU latency of the fused recurrent matmul)
    Bb = min(64, ((B + 7) // 8) * 8)
    Bp = ((B + Bb - 1) // Bb) * Bb                # padded batch
    Tt = int(time_block) if time_block else min(T, 128)
    n_t = pl.cdiv(T, Tt)
    n_b = Bp // Bb
    Tp = n_t * Tt

    # time-major, pad batch to multiple of Bb and time to multiple of Tt
    x_tm = jnp.transpose(x, (1, 0, 2)).astype(jnp.float32)          # [T, B, D]
    x_tm = jnp.pad(x_tm, ((0, Tp - T), (0, Bp - B), (0, 0)))
    emb = jnp.pad(speaker_embeddings.astype(jnp.float32), ((0, Bp - B), (0, 0)))

    # fused recurrent weight: [h1 | h2] @ W_big -> [g1_hh | g2]
    w_big = jnp.concatenate(
        [jnp.concatenate([params["w_hh1"], params["w_ih2"]], axis=1),
         jnp.concatenate([jnp.zeros((H, 4 * H), jnp.float32), params["w_hh2"]],
                         axis=1)],
        axis=0)                                                      # [2H, 8H]

    in_specs = [
        pl.BlockSpec((Tt, Bb, D), lambda b, t: (t, b, 0)),          # x
        pl.BlockSpec((Bb, E), lambda b, t: (b, 0)),                 # speaker emb
        pl.BlockSpec((E, D), lambda b, t: (0, 0)),                  # w_se
        pl.BlockSpec((1, D), lambda b, t: (0, 0)),                  # b_se
        pl.BlockSpec((D, 4 * H), lambda b, t: (0, 0)),              # w_ih1
        pl.BlockSpec((1, 4 * H), lambda b, t: (0, 0)),              # b1
        pl.BlockSpec((2 * H, 8 * H), lambda b, t: (0, 0)),          # w_big
        pl.BlockSpec((1, 4 * H), lambda b, t: (0, 0)),              # b2
    ]
    out_spec = pl.BlockSpec((Tt, Bb, H), lambda b, t: (t, b, 0))

    # advisory VMEM sizing (only raise the scoped limit when actually needed)
    est_vmem = 4 * (2 * Tt * Bb * D + 2 * Tt * Bb * H        # x / out (dbl-buf)
                    + Tt * Bb * 4 * H + 4 * Bb * H           # scratch
                    + 2 * (Bb * E + E * D + D
                           + D * 4 * H + 4 * H
                           + 2 * H * 8 * H + 4 * H))
    vmem_limit = None
    if est_vmem > 8 * 1024 * 1024:
        vmem_limit = int(min(96 * 1024 * 1024, 2 * est_vmem))

    h_all = pl.pallas_call(
        functools.partial(pvad_lstm_kernel, hidden_dim=H),
        out_shape=jax.ShapeDtypeStruct((Tp, Bp, H), jnp.float32),
        grid=(n_b, n_t),
        in_specs=in_specs,
        out_specs=out_spec,
        scratch_shapes=[
            pltpu.VMEM((Tt, Bb, 4 * H), jnp.float32),   # hoisted layer-1 gates
            pltpu.VMEM((Bb, 2 * H), jnp.float32),       # [h1 | h2] (carried)
            pltpu.VMEM((Bb, H), jnp.float32),           # c1
            pltpu.VMEM((Bb, H), jnp.float32),           # c2
        ],
        compiler_params=pltpu.CompilerParams(
            dimension_semantics=("parallel", "arbitrary"),
            vmem_limit_bytes=vmem_limit),
    )(x_tm, emb, params["w_se"], params["b_se"],
      params["w_ih1"], params["b1"], w_big, params["b2"])

    # pad_packed_sequence pads with zeros beyond each length; the tiny
    # lane-sparse fc (out_dim=3) and the mask run in XLA where they fuse.
    h = jnp.transpose(h_all[:T, :B, :], (1, 0, 2))                  # [B, T, H]
    mask = jnp.arange(T)[None, :] < lengths.astype(jnp.int32)[:, None]
    h = jnp.where(mask[..., None], h, 0.0)
    out = h @ params["w_fc"] + params["b_fc"]                       # [B, T, 3]
    return out, lengths


def pvad1et2_reference(x, speaker_embeddings, lengths, params, hidden_dim):
    """Pure-JAX reference for correctness check (returns the fc output)."""
    B, T, D = x.shape
    H = hidden_dim
    spk = speaker_embeddings @ params["w_se"] + params["b_se"]      # [B, D]
    x = x + spk[:, None, :]

    def cell(xt, h, c, w_ih, w_hh, b):
        g = xt @ w_ih + h @ w_hh + b
        i = jax.nn.sigmoid(g[:, :H])
        f = jax.nn.sigmoid(g[:, H:2 * H])
        gg = jnp.tanh(g[:, 2 * H:3 * H])
        o = jax.nn.sigmoid(g[:, 3 * H:])
        c = f * c + i * gg
        return o * jnp.tanh(c), c

    def step(carry, xt):
        h1, c1, h2, c2 = carry
        h1, c1 = cell(xt, h1, c1, params["w_ih1"], params["w_hh1"], params["b1"])
        h2, c2 = cell(h1, h2, c2, params["w_ih2"], params["w_hh2"], params["b2"])
        return (h1, c1, h2, c2), h2

    z = jnp.zeros((B, H), jnp.float32)
    _, hs = lax.scan(step, (z, z, z, z), jnp.transpose(x, (1, 0, 2)))
    hs = jnp.transpose(hs, (1, 0, 2))                               # [B, T, H]
    mask = jnp.arange(T)[None, :] < lengths[:, None]
    hs = jnp.where(mask[..., None], hs, 0.0)
    return hs @ params["w_fc"] + params["b_fc"]


if __name__ == "__main__":
    B, T = 2, 16
    input_dim, hidden_dim, embedding_dim = 16, 32, 32

    key = jax.random.PRNGKey(0)
    kx, ke, kp = jax.random.split(key, 3)
    x = jax.random.normal(kx, (B, T, input_dim), jnp.float32)
    speaker_emb = jax.random.normal(ke, (B, embedding_dim), jnp.float32)
    lengths = jnp.array([16, 11], jnp.int32)   # max(lengths) == T

    params = init_params(kp, input_dim, hidden_dim, embedding_dim)

    # time_block=8 -> 2 time chunks, exercising state carry across the grid
    out, out_lengths = pvad1et2_forward(x, speaker_emb, lengths, params,
                                        hidden_dim, time_block=8)
    out = jax.block_until_ready(out)

    ref = pvad1et2_reference(x, speaker_emb, lengths, params, hidden_dim)
    assert out.shape == (B, T, 3)
    assert jnp.allclose(out, ref, atol=1e-4, rtol=1e-4)

    print("KERNEL_OK")
</pallas_src>

<mosaic_0001>
module attributes {stable_mosaic.version = 11 : i64} {
  func.func @pvad_lstm_kernel(%arg0: i32, %arg1: i32, %arg2: memref<8x8x16xf32, #tpu.memory_space<vmem>>, %arg3: memref<8x32xf32, #tpu.memory_space<vmem>>, %arg4: memref<32x16xf32, #tpu.memory_space<vmem>>, %arg5: memref<1x16xf32, #tpu.memory_space<vmem>>, %arg6: memref<16x128xf32, #tpu.memory_space<vmem>>, %arg7: memref<1x128xf32, #tpu.memory_space<vmem>>, %arg8: memref<64x256xf32, #tpu.memory_space<vmem>>, %arg9: memref<1x128xf32, #tpu.memory_space<vmem>>, %arg10: memref<8x8x32xf32, #tpu.memory_space<vmem>>, %arg11: memref<8x8x128xf32, #tpu.memory_space<vmem>>, %arg12: memref<8x64xf32, #tpu.memory_space<vmem>>, %arg13: memref<8x32xf32, #tpu.memory_space<vmem>>, %arg14: memref<8x32xf32, #tpu.memory_space<vmem>>) attributes {dimension_semantics = [#tpu.dimension_semantics<parallel>, #tpu.dimension_semantics<arbitrary>], iteration_bounds = array<i64: 1, 2>, scalar_prefetch = 0 : i64, scratch_operands = 4 : i64, tpu.core_type = #tpu.core_type<tc>, window_params = [{transform_indices = @transform_0, window_bounds = array<i64: 8, 8, 16>}, {transform_indices = @transform_1, window_bounds = array<i64: 8, 32>}, {pipeline_mode = #tpu.pipeline_mode<synchronous>, transform_indices = @transform_2, window_bounds = array<i64: 32, 16>}, {pipeline_mode = #tpu.pipeline_mode<synchronous>, transform_indices = @transform_3, window_bounds = array<i64: 1, 16>}, {pipeline_mode = #tpu.pipeline_mode<synchronous>, transform_indices = @transform_4, window_bounds = array<i64: 16, 128>}, {pipeline_mode = #tpu.pipeline_mode<synchronous>, transform_indices = @transform_5, window_bounds = array<i64: 1, 128>}, {pipeline_mode = #tpu.pipeline_mode<synchronous>, transform_indices = @transform_6, window_bounds = array<i64: 64, 256>}, {pipeline_mode = #tpu.pipeline_mode<synchronous>, transform_indices = @transform_7, window_bounds = array<i64: 1, 128>}, {transform_indices = @transform_8, window_bounds = array<i64: 8, 8, 32>}]} {
    %c0_i32 = arith.constant 0 : i32
    %0 = arith.cmpi eq, %arg1, %c0_i32 : i32
    %1 = arith.extui %0 : i1 to i32
    %c0_i32_0 = arith.constant 0 : i32
    %2 = arith.cmpi ne, %1, %c0_i32_0 : i32
    scf.if %2 {
      %cst_47 = arith.constant 0.000000e+00 : f32
      %75 = vector.broadcast %cst_47 : f32 to vector<8x64xf32>
      %c0_48 = arith.constant 0 : index
      %c0_49 = arith.constant 0 : index
      %76 = vector.load %arg12[%c0_48, %c0_49] : memref<8x64xf32, #tpu.memory_space<vmem>>, vector<8x64xf32>
      tpu.vector_store %arg12[%c0_48, %c0_49], %75 {strides = array<i32>} : memref<8x64xf32, #tpu.memory_space<vmem>>, vector<8x64xf32>,
      %cst_50 = arith.constant 0.000000e+00 : f32
      %77 = vector.broadcast %cst_50 : f32 to vector<8x32xf32>
      %c0_51 = arith.constant 0 : index
      %c0_52 = arith.constant 0 : index
      %78 = vector.load %arg13[%c0_51, %c0_52] : memref<8x32xf32, #tpu.memory_space<vmem>>, vector<8x32xf32>
      tpu.vector_store %arg13[%c0_51, %c0_52], %77 {strides = array<i32>} : memref<8x32xf32, #tpu.memory_space<vmem>>, vector<8x32xf32>,
      %cst_53 = arith.constant 0.000000e+00 : f32
      %79 = vector.broadcast %cst_53 : f32 to vector<8x32xf32>
      %c0_54 = arith.constant 0 : index
      %c0_55 = arith.constant 0 : index
      %80 = vector.load %arg14[%c0_54, %c0_55] : memref<8x32xf32, #tpu.memory_space<vmem>>, vector<8x32xf32>
      tpu.vector_store %arg14[%c0_54, %c0_55], %79 {strides = array<i32>} : memref<8x32xf32, #tpu.memory_space<vmem>>, vector<8x32xf32>,
    } else {
    }
    %c0 = arith.constant 0 : index
    %c0_1 = arith.constant 0 : index
    %3 = vector.load %arg3[%c0, %c0_1] : memref<8x32xf32, #tpu.memory_space<vmem>>, vector<8x32xf32>
    %c0_2 = arith.constant 0 : index
    %c0_3 = arith.constant 0 : index
    %4 = vector.load %arg4[%c0_2, %c0_3] : memref<32x16xf32, #tpu.memory_space<vmem>>, vector<32x16xf32>
    %cst = arith.constant dense<0.000000e+00> : vector<8x16xf32>
    %5 = tpu.matmul %3, %4, %cst {dimension_numbers = #tpu.dot_dimension_numbers<[1], [0], [0], [1], [0, 0, 1, 1], [], []>} : vector<8x32xf32>, vector<32x16xf32>, vector<8x16xf32> -> vector<8x16xf32>
    %c0_4 = arith.constant 0 : index
    %c0_5 = arith.constant 0 : index
    %6 = vector.load %arg5[%c0_4, %c0_5] : memref<1x16xf32, #tpu.memory_space<vmem>>, vector<1x16xf32>
    %7 = vector.broadcast %6 : vector<1x16xf32> to vector<8x16xf32>
    %8 = arith.addf %5, %7 : vector<8x16xf32>
    %c0_6 = arith.constant 0 : index
    %c0_7 = arith.constant 0 : index
    %c0_8 = arith.constant 0 : index
    %9 = vector.load %arg2[%c0_6, %c0_7, %c0_8] : memref<8x8x16xf32, #tpu.memory_space<vmem>>, vector<8x8x16xf32>
    %10 = vector.shape_cast %8 : vector<8x16xf32> to vector<1x8x16xf32>
    %11 = vector.broadcast %10 : vector<1x8x16xf32> to vector<8x8x16xf32>
    %12 = arith.addf %9, %11 : vector<8x8x16xf32>
    %13 = vector.shape_cast %12 : vector<8x8x16xf32> to vector<64x16xf32>
    %c0_9 = arith.constant 0 : index
    %c0_10 = arith.constant 0 : index
    %14 = vector.load %arg6[%c0_9, %c0_10] : memref<16x128xf32, #tpu.memory_space<vmem>>, vector<16x128xf32>
    %cst_11 = arith.constant dense<0.000000e+00> : vector<64x128xf32>
    %15 = tpu.matmul %13, %14, %cst_11 {dimension_numbers = #tpu.dot_dimension_numbers<[1], [0], [0], [1], [0, 0, 1, 1], [], []>} : vector<64x16xf32>, vector<16x128xf32>, vector<64x128xf32> -> vector<64x128xf32>
    %c0_12 = arith.constant 0 : index
    %c0_13 = arith.constant 0 : index
    %16 = vector.load %arg7[%c0_12, %c0_13] : memref<1x128xf32, #tpu.memory_space<vmem>>, vector<1x128xf32>
    %17 = vector.broadcast %16 : vector<1x128xf32> to vector<64x128xf32>
    %18 = arith.addf %15, %17 : vector<64x128xf32>
    %19 = vector.shape_cast %18 : vector<64x128xf32> to vector<8x8x128xf32>
    %c0_14 = arith.constant 0 : index
    %c0_15 = arith.constant 0 : index
    %c0_16 = arith.constant 0 : index
    %20 = vector.load %arg11[%c0_14, %c0_15, %c0_16] : memref<8x8x128xf32, #tpu.memory_space<vmem>>, vector<8x8x128xf32>
    tpu.vector_store %arg11[%c0_14, %c0_15, %c0_16], %19 {strides = array<i32>} : memref<8x8x128xf32, #tpu.memory_space<vmem>>, vector<8x8x128xf32>,
    %c0_17 = arith.constant 0 : index
    %c0_18 = arith.constant 0 : index
    %21 = vector.load %arg8[%c0_17, %c0_18] : memref<64x256xf32, #tpu.memory_space<vmem>>, vector<64x256xf32>
    %c0_19 = arith.constant 0 : index
    %c0_20 = arith.constant 0 : index
    %22 = vector.load %arg9[%c0_19, %c0_20] : memref<1x128xf32, #tpu.memory_space<vmem>>, vector<1x128xf32>
    %23 = vector.shape_cast %22 : vector<1x128xf32> to vector<1x128xf32>
    %24 = vector.broadcast %23 : vector<1x128xf32> to vector<8x128xf32>
    %c0_21 = arith.constant 0 : index
    %c0_22 = arith.constant 0 : index
    %25 = vector.load %arg12[%c0_21, %c0_22] : memref<8x64xf32, #tpu.memory_space<vmem>>, vector<8x64xf32>
    %cst_23 = arith.constant dense<0.000000e+00> : vector<8x256xf32>
    %26 = tpu.matmul %25, %21, %cst_23 {dimension_numbers = #tpu.dot_dimension_numbers<[1], [0], [0], [1], [0, 0, 1, 1], [], []>} : vector<8x64xf32>, vector<64x256xf32>, vector<8x256xf32> -> vector<8x256xf32>
    %c0_24 = arith.constant 0 : index
    %c0_25 = arith.constant 0 : index
    %c0_26 = arith.constant 0 : index
    %27 = vector.load %arg11[%c0_24, %c0_25, %c0_26] : memref<8x8x128xf32, #tpu.memory_space<vmem>>, vector<1x8x128xf32>
    %28 = vector.shape_cast %27 : vector<1x8x128xf32> to vector<8x128xf32>
    %29 = vector.extract_strided_slice %26 {offsets = [0, 0], sizes = [8, 128], strides = [1, 1]} : vector<8x256xf32> to vector<8x128xf32>
    %30 = arith.addf %28, %29 : vector<8x128xf32>
    %c0_27 = arith.constant 0 : index
    %c0_28 = arith.constant 0 : index
    %31 = vector.load %arg13[%c0_27, %c0_28] : memref<8x32xf32, #tpu.memory_space<vmem>>, vector<8x32xf32>
    %32 = arith.negf %30 : vector<8x128xf32>
    %33 = math.exp %32 : vector<8x128xf32>
    %cst_29 = arith.constant 1.000000e+00 : f32
    %34 = vector.broadcast %cst_29 : f32 to vector<8x128xf32>
    %35 = arith.addf %34, %33 : vector<8x128xf32>
    %36 = arith.divf %34, %35 : vector<8x128xf32>
    %37 = vector.extract_strided_slice %36 {offsets = [0, 0], sizes = [8, 32], strides = [1, 1]} : vector<8x128xf32> to vector<8x32xf32>
    %38 = vector.extract_strided_slice %36 {offsets = [0, 32], sizes = [8, 32], strides = [1, 1]} : vector<8x128xf32> to vector<8x32xf32>
    %39 = vector.extract_strided_slice %36 {offsets = [0, 96], sizes = [8, 32], strides = [1, 1]} : vector<8x128xf32> to vector<8x32xf32>
    %40 = vector.extract_strided_slice %30 {offsets = [0, 64], sizes = [8, 32], strides = [1, 1]} : vector<8x128xf32> to vector<8x32xf32>
    %41 = math.tanh %40 : vector<8x32xf32>
    %42 = arith.mulf %38, %31 : vector<8x32xf32>
    %43 = arith.mulf %37, %41 : vector<8x32xf32>
    %44 = arith.addf %42, %43 : vector<8x32xf32>
    %45 = math.tanh %44 : vector<8x32xf32>
    %46 = arith.mulf %39, %45 : vector<8x32xf32>
    %c0_30 = arith.constant 0 : index
    %c0_31 = arith.constant 0 : index
    %47 = vector.load %arg12[%c0_30, %c0_31] : memref<8x64xf32, #tpu.memory_space<vmem>>, vector<8x32xf32>
    tpu.vector_store %arg12[%c0_30, %c0_31], %46 {strides = array<i32>} : memref<8x64xf32, #tpu.memory_space<vmem>>, vector<8x32xf32>,
    %c0_32 = arith.constant 0 : index
    %c0_33 = arith.constant 0 : index
    %48 = vector.load %arg13[%c0_32, %c0_33] : memref<8x32xf32, #tpu.memory_space<vmem>>, vector<8x32xf32>
    tpu.vector_store %arg13[%c0_32, %c0_33], %44 {strides = array<i32>} : memref<8x32xf32, #tpu.memory_space<vmem>>, vector<8x32xf32>,
    %c0_i32_34 = arith.constant 0 : i32
    %c7_i32 = arith.constant 7 : i32
    %49 = arith.addi %c0_i32_34, %c7_i32 : i32
    %c1_i32 = arith.constant 1 : i32
    scf.for %arg15 = %c0_i32_34 to %49 step %c1_i32  : i32 {
      %c1_i32_47 = arith.constant 1 : i32
      %75 = arith.muli %arg15, %c1_i32_47 : i32
      %c0_i32_48 = arith.constant 0 : i32
      %76 = arith.addi %c0_i32_48, %75 : i32
      %c0_49 = arith.constant 0 : index
      %c0_50 = arith.constant 0 : index
      %77 = vector.load %arg12[%c0_49, %c0_50] : memref<8x64xf32, #tpu.memory_space<vmem>>, vector<8x64xf32>
      %cst_51 = arith.constant dense<0.000000e+00> : vector<8x256xf32>
      %78 = tpu.matmul %77, %21, %cst_51 {dimension_numbers = #tpu.dot_dimension_numbers<[1], [0], [0], [1], [0, 0, 1, 1], [], []>} : vector<8x64xf32>, vector<64x256xf32>, vector<8x256xf32> -> vector<8x256xf32>
      %79 = vector.extract_strided_slice %78 {offsets = [0, 128], sizes = [8, 128], strides = [1, 1]} : vector<8x256xf32> to vector<8x128xf32>
      %80 = arith.addf %79, %24 : vector<8x128xf32>
      %c1_i32_52 = arith.constant 1 : i32
      %81 = arith.addi %76, %c1_i32_52 : i32
      %82 = arith.index_cast %81 : i32 to index
      %c0_53 = arith.constant 0 : index
      %c0_54 = arith.constant 0 : index
      %83 = vector.load %arg11[%82, %c0_53, %c0_54] : memref<8x8x128xf32, #tpu.memory_space<vmem>>, vector<1x8x128xf32>
      %84 = vector.shape_cast %83 : vector<1x8x128xf32> to vector<8x128xf32>
      %85 = vector.extract_strided_slice %78 {offsets = [0, 0], sizes = [8, 128], strides = [1, 1]} : vector<8x256xf32> to vector<8x128xf32>
      %86 = arith.addf %84, %85 : vector<8x128xf32>
      %c0_55 = arith.constant 0 : index
      %c0_56 = arith.constant 0 : index
      %87 = vector.load %arg14[%c0_55, %c0_56] : memref<8x32xf32, #tpu.memory_space<vmem>>, vector<8x32xf32>
      %88 = arith.negf %80 : vector<8x128xf32>
      %89 = math.exp %88 : vector<8x128xf32>
      %cst_57 = arith.constant 1.000000e+00 : f32
      %90 = vector.broadcast %cst_57 : f32 to vector<8x128xf32>
      %91 = arith.addf %90, %89 : vector<8x128xf32>
      %92 = arith.divf %90, %91 : vector<8x128xf32>
      %93 = vector.extract_strided_slice %92 {offsets = [0, 0], sizes = [8, 32], strides = [1, 1]} : vector<8x128xf32> to vector<8x32xf32>
      %94 = vector.extract_strided_slice %92 {offsets = [0, 32], sizes = [8, 32], strides = [1, 1]} : vector<8x128xf32> to vector<8x32xf32>
      %95 = vector.extract_strided_slice %92 {offsets = [0, 96], sizes = [8, 32], strides = [1, 1]} : vector<8x128xf32> to vector<8x32xf32>
      %96 = vector.extract_strided_slice %80 {offsets = [0, 64], sizes = [8, 32], strides = [1, 1]} : vector<8x128xf32> to vector<8x32xf32>
      %97 = math.tanh %96 : vector<8x32xf32>
      %98 = arith.mulf %94, %87 : vector<8x32xf32>
      %99 = arith.mulf %93, %97 : vector<8x32xf32>
      %100 = arith.addf %98, %99 : vector<8x32xf32>
      %101 = math.tanh %100 : vector<8x32xf32>
      %102 = arith.mulf %95, %101 : vector<8x32xf32>
      %c0_58 = arith.constant 0 : index
      %c0_59 = arith.constant 0 : index
      %103 = vector.load %arg13[%c0_58, %c0_59] : memref<8x32xf32, #tpu.memory_space<vmem>>, vector<8x32xf32>
      %104 = arith.negf %86 : vector<8x128xf32>
      %105 = math.exp %104 : vector<8x128xf32>
      %cst_60 = arith.constant 1.000000e+00 : f32
      %106 = vector.broadcast %cst_60 : f32 to vector<8x128xf32>
      %107 = arith.addf %106, %105 : vector<8x128xf32>
      %108 = arith.divf %106, %107 : vector<8x128xf32>
      %109 = vector.extract_strided_slice %108 {offsets = [0, 0], sizes = [8, 32], strides = [1, 1]} : vector<8x128xf32> to vector<8x32xf32>
      %110 = vector.extract_strided_slice %108 {offsets = [0, 32], sizes = [8, 32], strides = [1, 1]} : vector<8x128xf32> to vector<8x32xf32>
      %111 = vector.extract_strided_slice %108 {offsets = [0, 96], sizes = [8, 32], strides = [1, 1]} : vector<8x128xf32> to vector<8x32xf32>
      %112 = vector.extract_strided_slice %86 {offsets = [0, 64], sizes = [8, 32], strides = [1, 1]} : vector<8x128xf32> to vector<8x32xf32>
      %113 = math.tanh %112 : vector<8x32xf32>
      %114 = arith.mulf %110, %103 : vector<8x32xf32>
      %115 = arith.mulf %109, %113 : vector<8x32xf32>
      %116 = arith.addf %114, %115 : vector<8x32xf32>
      %117 = math.tanh %116 : vector<8x32xf32>
      %118 = arith.mulf %111, %117 : vector<8x32xf32>
      %119 = arith.index_cast %76 : i32 to index
      %c0_61 = arith.constant 0 : index
      %c0_62 = arith.constant 0 : index
      %120 = vector.load %arg10[%119, %c0_61, %c0_62] : memref<8x8x32xf32, #tpu.memory_space<vmem>>, vector<1x8x32xf32>
      %121 = vector.shape_cast %120 : vector<1x8x32xf32> to vector<8x32xf32>
      %122 = vector.shape_cast %102 : vector<8x32xf32> to vector<1x8x32xf32>
      tpu.vector_store %arg10[%119, %c0_61, %c0_62], %122 {strides = array<i32>} : memref<8x8x32xf32, #tpu.memory_space<vmem>>, vector<1x8x32xf32>,
      %c0_63 = arith.constant 0 : index
      %c32_64 = arith.constant 32 : index
      %123 = vector.load %arg12[%c0_63, %c32_64] : memref<8x64xf32, #tpu.memory_space<vmem>>, vector<8x32xf32>
      tpu.vector_store %arg12[%c0_63, %c32_64], %102 {strides = array<i32>} : memref<8x64xf32, #tpu.memory_space<vmem>>, vector<8x32xf32>,
      %c0_65 = arith.constant 0 : index
      %c0_66 = arith.constant 0 : index
      %124 = vector.load %arg14[%c0_65, %c0_66] : memref<8x32xf32, #tpu.memory_space<vmem>>, vector<8x32xf32>
      tpu.vector_store %arg14[%c0_65, %c0_66], %100 {strides = array<i32>} : memref<8x32xf32, #tpu.memory_space<vmem>>, vector<8x32xf32>,
      %c0_67 = arith.constant 0 : index
      %c0_68 = arith.constant 0 : index
      %125 = vector.load %arg12[%c0_67, %c0_68] : memref<8x64xf32, #tpu.memory_space<vmem>>, vector<8x32xf32>
      tpu.vector_store %arg12[%c0_67, %c0_68], %118 {strides = array<i32>} : memref<8x64xf32, #tpu.memory_space<vmem>>, vector<8x32xf32>,
      %c0_69 = arith.constant 0 : index
      %c0_70 = arith.constant 0 : index
      %126 = vector.load %arg13[%c0_69, %c0_70] : memref<8x32xf32, #tpu.memory_space<vmem>>, vector<8x32xf32>
      tpu.vector_store %arg13[%c0_69, %c0_70], %116 {strides = array<i32>} : memref<8x32xf32, #tpu.memory_space<vmem>>, vector<8x32xf32>,
    }
    %c7_i32_35 = arith.constant 7 : i32
    %c0_36 = arith.constant 0 : index
    %c0_37 = arith.constant 0 : index
    %50 = vector.load %arg12[%c0_36, %c0_37] : memref<8x64xf32, #tpu.memory_space<vmem>>, vector<8x64xf32>
    %cst_38 = arith.constant dense<0.000000e+00> : vector<8x256xf32>
    %51 = tpu.matmul %50, %21, %cst_38 {dimension_numbers = #tpu.dot_dimension_numbers<[1], [0], [0], [1], [0, 0, 1, 1], [], []>} : vector<8x64xf32>, vector<64x256xf32>, vector<8x256xf32> -> vector<8x256xf32>
    %52 = vector.extract_strided_slice %51 {offsets = [0, 128], sizes = [8, 128], strides = [1, 1]} : vector<8x256xf32> to vector<8x128xf32>
    %53 = arith.addf %52, %24 : vector<8x128xf32>
    %c0_39 = arith.constant 0 : index
    %c0_40 = arith.constant 0 : index
    %54 = vector.load %arg14[%c0_39, %c0_40] : memref<8x32xf32, #tpu.memory_space<vmem>>, vector<8x32xf32>
    %55 = arith.negf %53 : vector<8x128xf32>
    %56 = math.exp %55 : vector<8x128xf32>
    %cst_41 = arith.constant 1.000000e+00 : f32
    %57 = vector.broadcast %cst_41 : f32 to vector<8x128xf32>
    %58 = arith.addf %57, %56 : vector<8x128xf32>
    %59 = arith.divf %57, %58 : vector<8x128xf32>
    %60 = vector.extract_strided_slice %59 {offsets = [0, 0], sizes = [8, 32], strides = [1, 1]} : vector<8x128xf32> to vector<8x32xf32>
    %61 = vector.extract_strided_slice %59 {offsets = [0, 32], sizes = [8, 32], strides = [1, 1]} : vector<8x128xf32> to vector<8x32xf32>
    %62 = vector.extract_strided_slice %59 {offsets = [0, 96], sizes = [8, 32], strides = [1, 1]} : vector<8x128xf32> to vector<8x32xf32>
    %63 = vector.extract_strided_slice %53 {offsets = [0, 64], sizes = [8, 32], strides = [1, 1]} : vector<8x128xf32> to vector<8x32xf32>
    %64 = math.tanh %63 : vector<8x32xf32>
    %65 = arith.mulf %61, %54 : vector<8x32xf32>
    %66 = arith.mulf %60, %64 : vector<8x32xf32>
    %67 = arith.addf %65, %66 : vector<8x32xf32>
    %68 = math.tanh %67 : vector<8x32xf32>
    %69 = arith.mulf %62, %68 : vector<8x32xf32>
    %c7 = arith.constant 7 : index
    %c0_42 = arith.constant 0 : index
    %c0_43 = arith.constant 0 : index
    %70 = vector.load %arg10[%c7, %c0_42, %c0_43] : memref<8x8x32xf32, #tpu.memory_space<vmem>>, vector<1x8x32xf32>
    %71 = vector.shape_cast %70 : vector<1x8x32xf32> to vector<8x32xf32>
    %72 = vector.shape_cast %69 : vector<8x32xf32> to vector<1x8x32xf32>
    tpu.vector_store %arg10[%c7, %c0_42, %c0_43], %72 {strides = array<i32>} : memref<8x8x32xf32, #tpu.memory_space<vmem>>, vector<1x8x32xf32>,
    %c0_44 = arith.constant 0 : index
    %c32 = arith.constant 32 : index
    %73 = vector.load %arg12[%c0_44, %c32] : memref<8x64xf32, #tpu.memory_space<vmem>>, vector<8x32xf32>
    tpu.vector_store %arg12[%c0_44, %c32], %69 {strides = array<i32>} : memref<8x64xf32, #tpu.memory_space<vmem>>, vector<8x32xf32>,
    %c0_45 = arith.constant 0 : index
    %c0_46 = arith.constant 0 : index
    %74 = vector.load %arg14[%c0_45, %c0_46] : memref<8x32xf32, #tpu.memory_space<vmem>>, vector<8x32xf32>
    tpu.vector_store %arg14[%c0_45, %c0_46], %67 {strides = array<i32>} : memref<8x32xf32, #tpu.memory_space<vmem>>, vector<8x32xf32>,
    return
  }
  func.func @transform_0(%arg0: i32, %arg1: i32) -> (i32, i32, i32) {
    %c0_i32 = arith.constant 0 : i32
    %c0_i32_0 = arith.constant 0 : i32
    return %arg1, %arg0, %c0_i32 : i32, i32, i32
  }
  func.func @transform_1(%arg0: i32, %arg1: i32) -> (i32, i32) {
    %c0_i32 = arith.constant 0 : i32
    %c0_i32_0 = arith.constant 0 : i32
    return %arg0, %c0_i32 : i32, i32
  }
  func.func @transform_2(%arg0: i32, %arg1: i32) -> (i32, i32) {
    %c0_i32 = arith.constant 0 : i32
    %c0_i32_0 = arith.constant 0 : i32
    %c0_i32_1 = arith.constant 0 : i32
    return %c0_i32, %c0_i32_0 : i32, i32
  }
  func.func @transform_3(%arg0: i32, %arg1: i32) -> (i32, i32) {
    %c0_i32 = arith.constant 0 : i32
    %c0_i32_0 = arith.constant 0 : i32
    %c0_i32_1 = arith.constant 0 : i32
    return %c0_i32, %c0_i32_0 : i32, i32
  }
  func.func @transform_4(%arg0: i32, %arg1: i32) -> (i32, i32) {
    %c0_i32 = arith.constant 0 : i32
    %c0_i32_0 = arith.constant 0 : i32
    %c0_i32_1 = arith.constant 0 : i32
    return %c0_i32, %c0_i32_0 : i32, i32
  }
  func.func @transform_5(%arg0: i32, %arg1: i32) -> (i32, i32) {
    %c0_i32 = arith.constant 0 : i32
    %c0_i32_0 = arith.constant 0 : i32
    %c0_i32_1 = arith.constant 0 : i32
    return %c0_i32, %c0_i32_0 : i32, i32
  }
  func.func @transform_6(%arg0: i32, %arg1: i32) -> (i32, i32) {
    %c0_i32 = arith.constant 0 : i32
    %c0_i32_0 = arith.constant 0 : i32
    %c0_i32_1 = arith.constant 0 : i32
    return %c0_i32, %c0_i32_0 : i32, i32
  }
  func.func @transform_7(%arg0: i32, %arg1: i32) -> (i32, i32) {
    %c0_i32 = arith.constant 0 : i32
    %c0_i32_0 = arith.constant 0 : i32
    %c0_i32_1 = arith.constant 0 : i32
    return %c0_i32, %c0_i32_0 : i32, i32
  }
  func.func @transform_8(%arg0: i32, %arg1: i32) -> (i32, i32, i32) {
    %c0_i32 = arith.constant 0 : i32
    %c0_i32_0 = arith.constant 0 : i32
    return %arg1, %arg0, %c0_i32 : i32, i32, i32
  }
}

</mosaic_0001>

<llo_original>
// kernel: tpu_custom_call.1
$region0: #{tpu_custom_call.1}
  #allocation0 [shape = 'u32[]', space=smem, size = 0x4, offset = 0x4, fixed_abs, tag = 'smem constant byte address 0x4 - core index']
  #allocation1 [shape = 'u32[144,128]{1,0:T(1,128)}', space=vmem, size = 0x12000, scoped, tag = 'internal scratch']
  #allocation2 [shape = 'f32[8,8,128]{2,1,0:T(8,128)}', space=vmem, size = 0x8000, scoped, tag = 'scratch operand']
  #allocation3 [shape = 'f32[8,64]{1,0:T(8,128)}', space=vmem, size = 0x1000, scoped, tag = 'scratch operand']
  #allocation4 [shape = 'f32[8,32]{1,0:T(8,128)}', space=vmem, size = 0x1000, scoped, tag = 'scratch operand']
  #allocation5 [shape = 'f32[8,32]{1,0:T(8,128)}', space=vmem, size = 0x1000, scoped, tag = 'scratch operand']
  %s0 = inlined_call_operand.hbm [shape: f32[16,8,16], index: 0, kind: input, shape index: {}]
  %s1 = inlined_call_operand.vmem [shape: f32[8,32], index: 1, kind: input, shape index: {}]
  %s2 = inlined_call_operand.vmem [shape: f32[32,16], index: 2, kind: input, shape index: {}]
  %s3 = inlined_call_operand.vmem [shape: f32[1,16], index: 3, kind: input, shape index: {}]
  %s4 = inlined_call_operand.vmem [shape: f32[16,128], index: 4, kind: input, shape index: {}]
  %s5 = inlined_call_operand.vmem [shape: f32[1,128], index: 5, kind: input, shape index: {}]
  %s6 = inlined_call_operand.hbm [shape: f32[64,256], index: 6, kind: input, shape index: {}]
  %s7 = inlined_call_operand.vmem [shape: f32[1,128], index: 7, kind: input, shape index: {}]
  %s8 = inlined_call_operand.hbm [shape: f32[16,8,32], index: 8, kind: output, shape index: {}]
  %s9 = sld [smem:[#allocation0]]
  $region84: #{tpu_custom_call.1} parent=0
    _
  %s11 = ssub.s32 1, %s9
  %s12 = scalar_select 0, %s11, %s9
  $region1: #{tpu_custom_call.1} parent=0
    #allocation6 [shape = 'u8[65536]{0}', space=vmem, size = 0x10000, scoped, tag = 'input window, operand 0']
    #allocation7 [shape = 's32[2]{0}', space=sflag, size = 0x8, scoped, tag = 'scoped memory for tpu_custom_call.1']
    #allocation8 [shape = 's32[2]{0}', space=sflag, size = 0x8, scoped, tag = 'scoped memory for tpu_custom_call.1']
    #allocation9 [shape = 'u8[65536]{0}', space=vmem, size = 0x10000, scoped, tag = 'input window, operand 6, single buffered']
    #allocation10 [shape = 's32[1]{0}', space=sflag, size = 0x4, scoped, tag = 'scoped memory for tpu_custom_call.1']
    #allocation11 [shape = 'u8[65536]{0}', space=vmem, size = 0x10000, scoped, tag = 'output window, operand 0']
    %13 = vsyncpa [#allocation7], 0
    %s14 = scalar_lea.sflag [#allocation7], 1
    %15 = vsyncpa %s14, 0
    %16 = vsyncpa [#allocation10], 0
    %17 = vsyncpa [#allocation8], 0
    %s18 = scalar_lea.sflag [#allocation8], 1
    %19 = vsyncpa %s18, 0
    loop: start=0, step=1, limit=4
    $region2: #{tpu_custom_call.1} parent=1 // loop_pre_header
      _
    $region3: #{tpu_custom_call.1} parent=1 // loop_header
      %s21 = sphi 0, %s25
      %p22 = scmp.ge.s32.totalorder %s21, 4
      %s28 = sphi 0, %s40
      %s29 = sphi 0, %s36
      %s30 = sphi 0, %s28
      %s31 = sphi 0, %s29
      %s32 = sphi 0, %s30
      %s33 = sphi 0, %s31
      %s45 = sphi 0, %s47
      %s48 = sphi 0, %s45
      %s49 = sphi 0, %s48
      %s65 = sphi 0, %s49
      %s71 = sphi 0, %s73
      %s74 = sphi 0, %s71
      %s75 = sphi 0, %s74
      %s91 = sphi 0, %s75
      %s95 = sphi 0, %s95
      %s97 = sphi 0, %s95
      %s98 = sphi 0, %s97
      %s112 = sphi 0, %s98
      %s116 = sphi 0, %s116
      %s118 = sphi 0, %s116
      %s119 = sphi 0, %s118
      %s133 = sphi 0, %s119
      %s137 = sphi 0, %s137
      %s139 = sphi 0, %s137
      %s140 = sphi 0, %s139
      %s154 = sphi 0, %s140
      %s158 = sphi 0, %s158
      %s160 = sphi 0, %s158
      %s161 = sphi 0, %s160
      %s175 = sphi 0, %s161
      %s179 = sphi 0, %s179
      %s181 = sphi 0, %s179
      %s182 = sphi 0, %s181
      %s196 = sphi 0, %s182
      %s200 = sphi 0, %s200
      %s202 = sphi 0, %s200
      %s203 = sphi 0, %s202
      %s217 = sphi 0, %s203
      %s225 = sphi 0, %s227
      %s228 = sphi 0, %s225
      %s229 = sphi 0, %s228
      %s245 = sphi 0, %s229
    $region4: #{tpu_custom_call.1} parent=1 // loop_header_branch
      %24 = sbr.rel (%p22) target = $region8
    $region5: #{tpu_custom_call.1} parent=1 // loop_body
      %s26 = ssub.s32 %s21, 1
      %s27 = ssub.s32 %s21, 2
      %s34 = sadd.s32 1, %s29
      %p35 = scmp.ge.s32.totalorder %s34, 2
      %s36 = scalar_select %p35, 0, %s34
      %s37 = sadd.s32 1, %s28
      %s38 = scalar_select %p35, %s37, %s28
      %p39 = scmp.ge.s32.totalorder %s38, 1
      %s40 = scalar_select %p39, 0, %s38
      %s41 = ssub.s32 %s29, %s36
      %s42 = ssub.s32 %s28, %s40
      %s43 = sor.u32 %s41, %s42
      %p44 = scmp.eq.s32.totalorder %s43, 0
      %s46 = sadd.s32 %s45, 1
      %s47 = scalar_select %p44, %s45, %s46
      %p50 = pneg %p44
      %p51 = scmp.eq.s32.totalorder %s21, 1
      %p52 = por %p50, %p51
      %p53 = scmp.ne.s32.totalorder %s45, %s48
      %p54 = scmp.eq.s32.totalorder %s21, 0
      %p55 = por %p53, %p54
      %p56 = scmp.ne.s32.totalorder %s45, %s48
      %p57 = scmp.eq.s32.totalorder %s26, 1
      %p58 = por %p56, %p57
      %p59 = scmp.ne.s32.totalorder %s48, %s49
      %p60 = scmp.eq.s32.totalorder %s26, 0
      %p61 = por %p59, %p60
      %p62 = scmp.ne.s32.totalorder %s48, %s49
      %p63 = scmp.eq.s32.totalorder %s27, 1
      %p64 = por %p62, %p63
      %p66 = scmp.ne.s32.totalorder %s49, %s65
      %p67 = scmp.eq.s32.totalorder %s27, 0
      %p68 = por %p66, %p67
      %s69 = ssub.s32 %s28, %s40
      %p70 = scmp.eq.s32.totalorder %s69, 0
      %s72 = sadd.s32 %s71, 1
      %s73 = scalar_select %p70, %s71, %s72
      %p76 = pneg %p70
      %p77 = scmp.eq.s32.totalorder %s21, 1
      %p78 = por %p76, %p77
      %p79 = scmp.ne.s32.totalorder %s71, %s74
      %p80 = scmp.eq.s32.totalorder %s21, 0
      %p81 = por %p79, %p80
      %p82 = scmp.ne.s32.totalorder %s71, %s74
      %p83 = scmp.eq.s32.totalorder %s26, 1
      %p84 = por %p82, %p83
      %p85 = scmp.ne.s32.totalorder %s74, %s75
      %p86 = scmp.eq.s32.totalorder %s26, 0
      %p87 = por %p85, %p86
      %p88 = scmp.ne.s32.totalorder %s74, %s75
      %p89 = scmp.eq.s32.totalorder %s27, 1
      %p90 = por %p88, %p89
      %p92 = scmp.ne.s32.totalorder %s75, %s91
      %p93 = scmp.eq.s32.totalorder %s27, 0
      %p94 = por %p92, %p93
      %s96 = sadd.s32 %s95, 1
      %p99 = scmp.eq.s32.totalorder %s21, 1
      %p100 = scmp.ne.s32.totalorder %s95, %s97
      %p101 = scmp.eq.s32.totalorder %s21, 0
      %p102 = por %p100, %p101
      %p103 = scmp.ne.s32.totalorder %s95, %s97
      %p104 = scmp.eq.s32.totalorder %s26, 1
      %p105 = por %p103, %p104
      %p106 = scmp.ne.s32.totalorder %s97, %s98
      %p107 = scmp.eq.s32.totalorder %s26, 0
      %p108 = por %p106, %p107
      %p109 = scmp.ne.s32.totalorder %s97, %s98
      %p110 = scmp.eq.s32.totalorder %s27, 1
      %p111 = por %p109, %p110
      %p113 = scmp.ne.s32.totalorder %s98, %s112
      %p114 = scmp.eq.s32.totalorder %s27, 0
      %p115 = por %p113, %p114
      %s117 = sadd.s32 %s116, 1
      %p120 = scmp.eq.s32.totalorder %s21, 1
      %p121 = scmp.ne.s32.totalorder %s116, %s118
      %p122 = scmp.eq.s32.totalorder %s21, 0
      %p123 = por %p121, %p122
      %p124 = scmp.ne.s32.totalorder %s116, %s118
      %p125 = scmp.eq.s32.totalorder %s26, 1
      %p126 = por %p124, %p125
      %p127 = scmp.ne.s32.totalorder %s118, %s119
      %p128 = scmp.eq.s32.totalorder %s26, 0
      %p129 = por %p127, %p128
      %p130 = scmp.ne.s32.totalorder %s118, %s119
      %p131 = scmp.eq.s32.totalorder %s27, 1
      %p132 = por %p130, %p131
      %p134 = scmp.ne.s32.totalorder %s119, %s133
      %p135 = scmp.eq.s32.totalorder %s27, 0
      %p136 = por %p134, %p135
      %s138 = sadd.s32 %s137, 1
      %p141 = scmp.eq.s32.totalorder %s21, 1
      %p142 = scmp.ne.s32.totalorder %s137, %s139
      %p143 = scmp.eq.s32.totalorder %s21, 0
      %p144 = por %p142, %p143
      %p145 = scmp.ne.s32.totalorder %s137, %s139
      %p146 = scmp.eq.s32.totalorder %s26, 1
      %p147 = por %p145, %p146
      %p148 = scmp.ne.s32.totalorder %s139, %s140
      %p149 = scmp.eq.s32.totalorder %s26, 0
      %p150 = por %p148, %p149
      %p151 = scmp.ne.s32.totalorder %s139, %s140
      %p152 = scmp.eq.s32.totalorder %s27, 1
      %p153 = por %p151, %p152
      %p155 = scmp.ne.s32.totalorder %s140, %s154
      %p156 = scmp.eq.s32.totalorder %s27, 0
      %p157 = por %p155, %p156
      %s159 = sadd.s32 %s158, 1
      %p162 = scmp.eq.s32.totalorder %s21, 1
      %p163 = scmp.ne.s32.totalorder %s158, %s160
      %p164 = scmp.eq.s32.totalorder %s21, 0
      %p165 = por %p163, %p164
      %p166 = scmp.ne.s32.totalorder %s158, %s160
      %p167 = scmp.eq.s32.totalorder %s26, 1
      %p168 = por %p166, %p167
      %p169 = scmp.ne.s32.totalorder %s160, %s161
      %p170 = scmp.eq.s32.totalorder %s26, 0
      %p171 = por %p169, %p170
      %p172 = scmp.ne.s32.totalorder %s160, %s161
      %p173 = scmp.eq.s32.totalorder %s27, 1
      %p174 = por %p172, %p173
      %p176 = scmp.ne.s32.totalorder %s161, %s175
      %p177 = scmp.eq.s32.totalorder %s27, 0
      %p178 = por %p176, %p177
      %s180 = sadd.s32 %s179, 1
      %p183 = scmp.eq.s32.totalorder %s21, 1
      %p184 = scmp.ne.s32.totalorder %s179, %s181
      %p185 = scmp.eq.s32.totalorder %s21, 0
      %p186 = por %p184, %p185
      %p187 = scmp.ne.s32.totalorder %s179, %s181
      %p188 = scmp.eq.s32.totalorder %s26, 1
      %p189 = por %p187, %p188
      %p190 = scmp.ne.s32.totalorder %s181, %s182
      %p191 = scmp.eq.s32.totalorder %s26, 0
      %p192 = por %p190, %p191
      %p193 = scmp.ne.s32.totalorder %s181, %s182
      %p194 = scmp.eq.s32.totalorder %s27, 1
      %p195 = por %p193, %p194
      %p197 = scmp.ne.s32.totalorder %s182, %s196
      %p198 = scmp.eq.s32.totalorder %s27, 0
      %p199 = por %p197, %p198
      %s201 = sadd.s32 %s200, 1
      %p204 = scmp.eq.s32.totalorder %s21, 1
      %p205 = scmp.ne.s32.totalorder %s200, %s202
      %p206 = scmp.eq.s32.totalorder %s21, 0
      %p207 = por %p205, %p206
      %p208 = scmp.ne.s32.totalorder %s200, %s202
      %p209 = scmp.eq.s32.totalorder %s26, 1
      %p210 = por %p208, %p209
      %p211 = scmp.ne.s32.totalorder %s202, %s203
      %p212 = scmp.eq.s32.totalorder %s26, 0
      %p213 = por %p211, %p212
      %p214 = scmp.ne.s32.totalorder %s202, %s203
      %p215 = scmp.eq.s32.totalorder %s27, 1
      %p216 = por %p214, %p215
      %p218 = scmp.ne.s32.totalorder %s203, %s217
      %p219 = scmp.eq.s32.totalorder %s27, 0
      %p220 = por %p218, %p219
      %s221 = ssub.s32 %s29, %s36
      %s222 = ssub.s32 %s28, %s40
      %s223 = sor.u32 %s221, %s222
      %p224 = scmp.eq.s32.totalorder %s223, 0
      %s226 = sadd.s32 %s225, 1
      %s227 = scalar_select %p224, %s225, %s226
      %p230 = pneg %p224
      %p231 = scmp.eq.s32.totalorder %s21, 1
      %p232 = por %p230, %p231
      %p233 = scmp.ne.s32.totalorder %s225, %s228
      %p234 = scmp.eq.s32.totalorder %s21, 0
      %p235 = por %p233, %p234
      %p236 = scmp.ne.s32.totalorder %s225, %s228
      %p237 = scmp.eq.s32.totalorder %s26, 1
      %p238 = por %p236, %p237
      %p239 = scmp.ne.s32.totalorder %s228, %s229
      %p240 = scmp.eq.s32.totalorder %s26, 0
      %p241 = por %p239, %p240
      %p242 = scmp.ne.s32.totalorder %s228, %s229
      %p243 = scmp.eq.s32.totalorder %s27, 1
      %p244 = por %p242, %p243
      %p246 = scmp.ne.s32.totalorder %s229, %s245
      %p247 = scmp.eq.s32.totalorder %s27, 0
      %p248 = por %p246, %p247
      %p249 = scmp.le.s32.totalorder 1, %s21
      %p250 = scmp.lt.s32.totalorder %s21, 3
      %p251 = pnand %p249, %p250
      %p252 = pneg %p251
      // Predicated region
      $region9: #{tpu_custom_call.1} parent=5 // pred_check
        _
      $region10: #{tpu_custom_call.1} parent=5 // pred_check_branch
        %254 = sbr.rel (%p251) target = $region12
      $region11: #{tpu_custom_call.1} parent=5 // pred_region
        %s255 = ssub.s32 %s21, 1
        // Predicated region
        $region13: #{tpu_custom_call.1} parent=11 // pred_check
          %p256 = pneg %p87
        $region14: #{tpu_custom_call.1} parent=11 // pred_check_branch
          %258 = sbr.rel (%p256) target = $region16
        $region15: #{tpu_custom_call.1} parent=11 // pred_region
          %p259 = scmp.lt.s32.totalorder %s30, 0
          %s260 = scalar_select %p259, %s30, 0
          %s261 = smul.addr %s260, 8
          %s262 = scalar_lea.vmem %s1, %s261
        $region16: #{tpu_custom_call.1} parent=11 // pred_fallthru
          _
        // Predicated region
        $region17: #{tpu_custom_call.1} parent=11 // pred_check
          %p263 = pneg %p108
        $region18: #{tpu_custom_call.1} parent=11 // pred_check_branch
          %265 = sbr.rel (%p263) target = $region20
        $region19: #{tpu_custom_call.1} parent=11 // pred_region
          _
        $region20: #{tpu_custom_call.1} parent=11 // pred_fallthru
          _
        // Predicated region
        $region21: #{tpu_custom_call.1} parent=11 // pred_check
          %p266 = pneg %p129
        $region22: #{tpu_custom_call.1} parent=11 // pred_check_branch
          %268 = sbr.rel (%p266) target = $region24
        $region23: #{tpu_custom_call.1} parent=11 // pred_region
          _
        $region24: #{tpu_custom_call.1} parent=11 // pred_fallthru
          _
        // Predicated region
        $region25: #{tpu_custom_call.1} parent=11 // pred_check
          %p269 = pneg %p150
        $region26: #{tpu_custom_call.1} parent=11 // pred_check_branch
          %271 = sbr.rel (%p269) target = $region28
        $region27: #{tpu_custom_call.1} parent=11 // pred_region
          _
        $region28: #{tpu_custom_call.1} parent=11 // pred_fallthru
          _
        // Predicated region
        $region29: #{tpu_custom_call.1} parent=11 // pred_check
          %p272 = pneg %p171
        $region30: #{tpu_custom_call.1} parent=11 // pred_check_branch
          %274 = sbr.rel (%p272) target = $region32
        $region31: #{tpu_custom_call.1} parent=11 // pred_region
          _
        $region32: #{tpu_custom_call.1} parent=11 // pred_fallthru
          _
        // Predicated region
        $region33: #{tpu_custom_call.1} parent=11 // pred_check
          %p275 = pneg %p192
        $region34: #{tpu_custom_call.1} parent=11 // pred_check_branch
          %277 = sbr.rel (%p275) target = $region36
        $region35: #{tpu_custom_call.1} parent=11 // pred_region
          %s279 = ssub.s32 2048, 2048
          %280 = vsyncadd [#allocation10], %s279
          %s281 = sshll.u32 [#allocation9], 4
          %s282 = int_to_ptr.vmem [resolvable:$true] %s281
          %287 = dma.hbm_to_vmem [thread:$0]  %s6, 2048, %s282, [#allocation10], 256, 256, 16
        $region36: #{tpu_custom_call.1} parent=11 // pred_fallthru
          _
        // Predicated region
        $region37: #{tpu_custom_call.1} parent=11 // pred_check
          %p288 = pneg %p213
        $region38: #{tpu_custom_call.1} parent=11 // pred_check_branch
          %290 = sbr.rel (%p288) target = $region40
        $region39: #{tpu_custom_call.1} parent=11 // pred_region
          _
        $region40: #{tpu_custom_call.1} parent=11 // pred_fallthru
          _
      $region12: #{tpu_custom_call.1} parent=5 // pred_fallthru
        _
      %p291 = scmp.lt.s32.totalorder %s21, 2
      // Predicated region
      $region41: #{tpu_custom_call.1} parent=5 // pred_check
        %p292 = pneg %p291
      $region42: #{tpu_custom_call.1} parent=5 // pred_check_branch
        %294 = sbr.rel (%p292) target = $region44
      $region43: #{tpu_custom_call.1} parent=5 // pred_region
        // Predicated region
        $region45: #{tpu_custom_call.1} parent=43 // pred_check
          %p295 = pneg %p55
        $region46: #{tpu_custom_call.1} parent=43 // pred_check_branch
          %297 = sbr.rel (%p295) target = $region48
        $region47: #{tpu_custom_call.1} parent=43 // pred_region
          %s298 = sand.u32 %s45, 1
          %s299 = scalar_lea.sflag [#allocation7], %s298
          %s300 = sand.u32 %s45, 1
          %s301 = smul.addr %s300, 64
          %s302 = scalar_lea.vmem [#allocation6], %s301
          %s303 = smul.u32 8, %s29
          %s305 = ssub.s32 1024, 1024
          %306 = vsyncadd %s299, %s305
          %s307 = sadd.s32 %s28, %s303
          %s308 = smul.addr %s307, 128
          %s309 = scalar_lea.hbm %s0, %s308
          %s310 = sshll.u32 %s302, 4
          %s311 = int_to_ptr.vmem [resolvable:$true] %s310
          %316 = dma.hbm_to_vmem [thread:$0]  %s309, 1024, %s311, %s299, 128, 128, 8
        $region48: #{tpu_custom_call.1} parent=43 // pred_fallthru
          _
      $region44: #{tpu_custom_call.1} parent=5 // pred_fallthru
        _
      %p317 = scmp.le.s32.totalorder 1, %s21
      %p318 = scmp.lt.s32.totalorder %s21, 3
      %p319 = pnand %p317, %p318
      %p320 = pneg %p319
      // Predicated region
      $region49: #{tpu_custom_call.1} parent=5 // pred_check
        _
      $region50: #{tpu_custom_call.1} parent=5 // pred_check_branch
        %322 = sbr.rel (%p319) target = $region52
      $region51: #{tpu_custom_call.1} parent=5 // pred_region
        %s323 = ssub.s32 %s21, 1
        %s324 = sand.u32 %s48, 1
        %s325 = scalar_lea.sflag [#allocation7], %s324
        %s326 = sand.u32 %s48, 1
        %s327 = smul.addr %s326, 64
        %s328 = scalar_lea.vmem [#allocation6], %s327
        // Predicated region
        $region53: #{tpu_custom_call.1} parent=51 // pred_check
          %p329 = pneg %p61
        $region54: #{tpu_custom_call.1} parent=51 // pred_check_branch
          %331 = sbr.rel (%p329) target = $region56
        $region55: #{tpu_custom_call.1} parent=51 // pred_region
          %332 = dma.done %s325, 1024
        $region56: #{tpu_custom_call.1} parent=51 // pred_fallthru
          _
        // Predicated region
        $region57: #{tpu_custom_call.1} parent=51 // pred_check
          %p333 = pneg %p192
        $region58: #{tpu_custom_call.1} parent=51 // pred_check_branch
          %335 = sbr.rel (%p333) target = $region60
        $region59: #{tpu_custom_call.1} parent=51 // pred_region
          %336 = dma.done [#allocation10], 2048
        $region60: #{tpu_custom_call.1} parent=51 // pred_fallthru
          _
        %s337 = sand.u32 %s48, 1
        %s338 = scalar_lea.sflag [#allocation7], %s337
        %s339 = sand.u32 %s48, 1
        %s340 = smul.addr %s339, 64
        %s341 = scalar_lea.vmem [#allocation6], %s340
        %p342 = pneg %p61
        %p343 = pneg %p58
        %p344 = scmp.lt.s32.totalorder %s30, 0
        %s345 = scalar_select %p344, %s30, 0
        %s346 = smul.addr %s345, 8
        %s347 = scalar_lea.vmem %s1, %s346
        %p348 = pneg %p87
        %p349 = pneg %p84
        %p350 = pneg %p108
        %p351 = pneg %p105
        %p352 = pneg %p129
        %p353 = pneg %p126
        %p354 = pneg %p150
        %p355 = pneg %p147
        %p356 = pneg %p171
        %p357 = pneg %p168
        %p358 = pneg %p192
        %p359 = pneg %p189
        %p360 = pneg %p213
        %p361 = pneg %p210
        %p362 = pneg %p241
        %p363 = pneg %p238
        %s364 = sand.u32 %s228, 1
        %s365 = scalar_lea.sflag [#allocation8], %s364
        %s366 = sand.u32 %s228, 1
        %s367 = smul.addr %s366, 64
        %s368 = scalar_lea.vmem [#allocation11], %s367
        %s369 = smul.u32 8, %s31
        %p370 = scmp.lt.s32.totalorder %s30, 0
        %s371 = scalar_select %p370, %s30, 0
        %s372 = smul.addr %s371, 8
        %s373 = scalar_lea.vmem %s1, %s372
        %s374 = smul.u32 8, %s31
        %p375 = scmp.eq.s32.totalorder %s31, 0
        // Predicated region
        $region61: #{tpu_custom_call.1} parent=51 // pred_check
          %p376 = pneg %p375
        $region62: #{tpu_custom_call.1} parent=51 // pred_check_branch
          %378 = sbr.rel (%p376) target = $region64
        $region63: #{tpu_custom_call.1} parent=51 // pred_region
          %vm379 = vcmask 523264
          %380 = vst.msk [vmem:[#allocation3] sm:$0xff] %vm379, 0.0
          %vm381 = vcmask 261120
          %382 = vst.msk [vmem:[#allocation4] sm:$0xff] %vm381, 0.0
          %383 = vst.msk [vmem:[#allocation5] sm:$0xff] %vm381, 0.0
        $region64: #{tpu_custom_call.1} parent=51 // pred_fallthru
          _
        %v384 = vld [vmem:[%s373] sm:$0xff]
        %v385 = vld [vmem:[%s2] sm:$0xff]
        %v386 = vld [vmem:[%s2 + $0x8] sm:$0xff]
        %v387 = vld [vmem:[%s2 + $0x10] sm:$0xff]
        %v388 = vld [vmem:[%s2 + $0x18] sm:$0xff]
        %v389 = vld [vmem:[%s3] sm:$0x1]
        %v391 = vlaneseq
        %v392 = vshrl.u32 %v391, 7
        %v393 = vsub.s32 0, %v392
        %v394 = vrot.slane %v389, %v393
        %vm396 = vcmask 261120
        %v398 = vsel %vm396, %v384, 0
        %400 = vmatprep.subr.mxu0 0.0
        %401 = vmatpush1.msra.mxu0 %v385
        %402 = vmatprep.subr.mxu0 0.0
        %403 = vmatpush1.msra.mxu0 %v386
        %404 = vmatprep.subr.mxu0 0.0
        %405 = vmatpush1.msra.mxu0 %v387
        %406 = vmatprep.subr.mxu0 0.0
        %407 = vmatpush1.msra.mxu0 %v388
        %408 = vmatprep.subr.mxu0 0.0
        %409 = vmatpush1.msra.mxu0 0.0
        %410 = vmatprep.subr.mxu0 0.0
        %411 = vmatpush1.msra.mxu0 0.0
        %412 = vmatprep.subr.mxu0 0.0
        %413 = vmatpush1.msra.mxu0 0.0
        %414 = vmatprep.subr.mxu0 0.0
        %415 = vmatpush1.msra.mxu0 0.0
        %416 = vmatprep.subr.mxu0 0.0
        %417 = vmatpush1.msra.mxu0 0.0
        %418 = vmatprep.subr.mxu0 0.0
        %419 = vmatpush1.msra.mxu0 0.0
        %420 = vmatprep.subr.mxu0 0.0
        %421 = vmatpush1.msra.mxu0 0.0
        %422 = vmatprep.subr.mxu0 0.0
        %423 = vmatpush1.msra.mxu0 0.0
        %424 = vmatprep.subr.mxu0 0.0
        %425 = vmatpush1.msra.mxu0 0.0
        %426 = vmatprep.subr.mxu0 0.0
        %427 = vmatpush1.msra.mxu0 0.0
        %428 = vmatprep.subr.mxu0 0.0
        %429 = vmatpush1.msra.mxu0 0.0
        %430 = vmatprep.subr.mxu0 0.0
        %431 = vmatpush1.msra.mxu0 0.0
        %432 = vmatprep.subr.mxu0 0.0
        %433 = vmatpush1.msra.mxu0 0.0
        %434 = vmatprep.subr.mxu0 0.0
        %435 = vmatpush1.msra.mxu0 0.0
        %436 = vmatprep.subr.mxu0 0.0
        %437 = vmatpush1.msra.mxu0 0.0
        %438 = vmatprep.subr.mxu0 0.0
        %439 = vmatpush1.msra.mxu0 0.0
        %440 = vmatprep.subr.mxu0 0.0
        %441 = vmatpush1.msra.mxu0 0.0
        %442 = vmatprep.subr.mxu0 0.0
        %443 = vmatpush1.msra.mxu0 0.0
        %444 = vmatprep.subr.mxu0 0.0
        %445 = vmatpush1.msra.mxu0 0.0
        %446 = vmatprep.subr.mxu0 0.0
        %447 = vmatpush1.msra.mxu0 0.0
        %448 = vmatprep.subr.mxu0 0.0
        %449 = vmatpush1.msra.mxu0 0.0
        %450 = vmatprep.subr.mxu0 0.0
        %451 = vmatpush1.msra.mxu0 0.0
        %452 = vmatprep.subr.mxu0 0.0
        %453 = vmatpush1.msra.mxu0 0.0
        %454 = vmatprep.subr.mxu0 0.0
        %455 = vmatpush1.msra.mxu0 0.0
        %456 = vmatprep.subr.mxu0 0.0
        %457 = vmatpush1.msra.mxu0 0.0
        %458 = vmatprep.subr.mxu0 0.0
        %459 = vmatpush1.msra.mxu0 0.0
        %460 = vmatprep.subr.mxu0 0.0
        %461 = vmatpush1.msra.mxu0 0.0
        %462 = vmatprep.subr.mxu0 0.0
        %463 = vmatpush1.msra.mxu0 0.0
        %464 = vmatprep.mubr.f32.mxu0 0.0
        %465 = vmatmul.mubr.f32.gmra.mrb[0].mxu0 %v398
        %v466 = vpop.f32.mrb[0].mxu0
        %v467 = vadd.f32 %v394, %v466
        %v468 = vpop.f32.mrb[0].mxu0
        %469 = vdwg.mxu0
        %v470 = vld [vmem:[%s328] sm:$0xff]
        %v471 = vld [vmem:[%s328 + $0x8] sm:$0xff]
        %v472 = vld [vmem:[%s328 + $0x10] sm:$0xff]
        %v473 = vld [vmem:[%s328 + $0x18] sm:$0xff]
        %v474 = vld [vmem:[%s328 + $0x20] sm:$0xff]
        %v475 = vld [vmem:[%s328 + $0x28] sm:$0xff]
        %v476 = vld [vmem:[%s328 + $0x30] sm:$0xff]
        %v477 = vld [vmem:[%s328 + $0x38] sm:$0xff]
        %v478 = vadd.f32 %v470, %v467
        %v479 = vadd.f32 %v471, %v467
        %v480 = vadd.f32 %v472, %v467
        %v481 = vadd.f32 %v473, %v467
        %v482 = vadd.f32 %v474, %v467
        %v483 = vadd.f32 %v475, %v467
        %v484 = vadd.f32 %v476, %v467
        %v485 = vadd.f32 %v477, %v467
        %v486 = vld [vmem:[%s4] sm:$0xff]
        %v487 = vld [vmem:[%s4 + $0x8] sm:$0xff]
        %v488 = vld [vmem:[%s5] sm:$0x1]
        %v490 = vlaneseq
        %v491 = vshrl.u32 %v490, 7
        %v492 = vsub.s32 0, %v491
        %v493 = vrot.slane %v488, %v492
        %vm495 = vcmask 130048
        %v497 = vsel %vm495, %v478, 0
        %v500 = vsel %vm495, %v479, 0
        %v503 = vsel %vm495, %v480, 0
        %v506 = vsel %vm495, %v481, 0
        %v509 = vsel %vm495, %v482, 0
        %v512 = vsel %vm495, %v483, 0
        %v515 = vsel %vm495, %v484, 0
        %v518 = vsel %vm495, %v485, 0
        %520 = vmatprep.subr.mxu0 0.0
        %521 = vmatpush1.msra.mxu0 %v486
        %522 = vmatprep.subr.mxu0 0.0
        %523 = vmatpush1.msra.mxu0 %v487
        %524 = vmatprep.subr.mxu0 0.0
        %525 = vmatpush1.msra.mxu0 0.0
        %526 = vmatprep.subr.mxu0 0.0
        %527 = vmatpush1.msra.mxu0 0.0
        %528 = vmatprep.subr.mxu0 0.0
        %529 = vmatpush1.msra.mxu0 0.0
        %530 = vmatprep.subr.mxu0 0.0
        %531 = vmatpush1.msra.mxu0 0.0
        %532 = vmatprep.subr.mxu0 0.0
        %533 = vmatpush1.msra.mxu0 0.0
        %534 = vmatprep.subr.mxu0 0.0
        %535 = vmatpush1.msra.mxu0 0.0
        %536 = vmatprep.subr.mxu0 0.0
        %537 = vmatpush1.msra.mxu0 0.0
        %538 = vmatprep.subr.mxu0 0.0
        %539 = vmatpush1.msra.mxu0 0.0
        %540 = vmatprep.subr.mxu0 0.0
        %541 = vmatpush1.msra.mxu0 0.0
        %542 = vmatprep.subr.mxu0 0.0
        %543 = vmatpush1.msra.mxu0 0.0
        %544 = vmatprep.subr.mxu0 0.0
        %545 = vmatpush1.msra.mxu0 0.0
        %546 = vmatprep.subr.mxu0 0.0
        %547 = vmatpush1.msra.mxu0 0.0
        %548 = vmatprep.subr.mxu0 0.0
        %549 = vmatpush1.msra.mxu0 0.0
        %550 = vmatprep.subr.mxu0 0.0
        %551 = vmatpush1.msra.mxu0 0.0
        %552 = vmatprep.subr.mxu0 0.0
        %553 = vmatpush1.msra.mxu0 0.0
        %554 = vmatprep.subr.mxu0 0.0
        %555 = vmatpush1.msra.mxu0 0.0
        %556 = vmatprep.subr.mxu0 0.0
        %557 = vmatpush1.msra.mxu0 0.0
        %558 = vmatprep.subr.mxu0 0.0
        %559 = vmatpush1.msra.mxu0 0.0
        %560 = vmatprep.subr.mxu0 0.0
        %561 = vmatpush1.msra.mxu0 0.0
        %562 = vmatprep.subr.mxu0 0.0
        %563 = vmatpush1.msra.mxu0 0.0
        %564 = vmatprep.subr.mxu0 0.0
        %565 = vmatpush1.msra.mxu0 0.0
        %566 = vmatprep.subr.mxu0 0.0
        %567 = vmatpush1.msra.mxu0 0.0
        %568 = vmatprep.subr.mxu0 0.0
        %569 = vmatpush1.msra.mxu0 0.0
        %570 = vmatprep.subr.mxu0 0.0
        %571 = vmatpush1.msra.mxu0 0.0
        %572 = vmatprep.subr.mxu0 0.0
        %573 = vmatpush1.msra.mxu0 0.0
        %574 = vmatprep.subr.mxu0 0.0
        %575 = vmatpush1.msra.mxu0 0.0
        %576 = vmatprep.subr.mxu0 0.0
        %577 = vmatpush1.msra.mxu0 0.0
        %578 = vmatprep.subr.mxu0 0.0
        %579 = vmatpush1.msra.mxu0 0.0
        %580 = vmatprep.subr.mxu0 0.0
        %581 = vmatpush1.msra.mxu0 0.0
        %582 = vmatprep.subr.mxu0 0.0
        %583 = vmatpush1.msra.mxu0 0.0
        %584 = vmatprep.mubr.f32.mxu0 0.0
        %585 = vmatmul.mubr.f32.gmra.mrb[0].mxu0 %v497
        %v586 = vpop.f32.mrb[0].mxu0
        %v587 = vadd.f32 %v493, %v586
        %v588 = vpop.f32.mrb[0].mxu0
        %589 = vmatprep.mubr.f32.mxu0 0.0
        %590 = vmatmul.mubr.f32.gmra.mrb[0].mxu0 %v500
        %v591 = vpop.f32.mrb[0].mxu0
        %v592 = vadd.f32 %v493, %v591
        %v593 = vpop.f32.mrb[0].mxu0
        %594 = vmatprep.mubr.f32.mxu0 0.0
        %595 = vmatmul.mubr.f32.gmra.mrb[0].mxu0 %v503
        %v596 = vpop.f32.mrb[0].mxu0
        %v597 = vadd.f32 %v493, %v596
        %v598 = vpop.f32.mrb[0].mxu0
        %599 = vmatprep.mubr.f32.mxu0 0.0
        %600 = vmatmul.mubr.f32.gmra.mrb[0].mxu0 %v506
        %v601 = vpop.f32.mrb[0].mxu0
        %v602 = vadd.f32 %v493, %v601
        %v603 = vpop.f32.mrb[0].mxu0
        %604 = vmatprep.mubr.f32.mxu0 0.0
        %605 = vmatmul.mubr.f32.gmra.mrb[0].mxu0 %v509
        %v606 = vpop.f32.mrb[0].mxu0
        %v607 = vadd.f32 %v493, %v606
        %v608 = vpop.f32.mrb[0].mxu0
        %609 = vmatprep.mubr.f32.mxu0 0.0
        %610 = vmatmul.mubr.f32.gmra.mrb[0].mxu0 %v512
        %v611 = vpop.f32.mrb[0].mxu0
        %v612 = vadd.f32 %v493, %v611
        %v613 = vpop.f32.mrb[0].mxu0
        %614 = vmatprep.mubr.f32.mxu0 0.0
        %615 = vmatmul.mubr.f32.gmra.mrb[0].mxu0 %v515
        %v616 = vpop.f32.mrb[0].mxu0
        %v617 = vadd.f32 %v493, %v616
        %v618 = vpop.f32.mrb[0].mxu0
        %619 = vmatprep.mubr.f32.mxu0 0.0
        %620 = vmatmul.mubr.f32.gmra.mrb[0].mxu0 %v518
        %v621 = vpop.f32.mrb[0].mxu0
        %v622 = vadd.f32 %v493, %v621
        %v623 = vpop.f32.mrb[0].mxu0
        %624 = vdwg.mxu0
        %625 = vst [vmem:[#allocation2] sm:$0xff] %v587
        %626 = vst [vmem:[#allocation2 + $0x8] sm:$0xff] %v592
        %627 = vst [vmem:[#allocation2 + $0x10] sm:$0xff] %v597
        %628 = vst [vmem:[#allocation2 + $0x18] sm:$0xff] %v602
        %629 = vst [vmem:[#allocation2 + $0x20] sm:$0xff] %v607
        %630 = vst [vmem:[#allocation2 + $0x28] sm:$0xff] %v612
        %631 = vst [vmem:[#allocation2 + $0x30] sm:$0xff] %v617
        %632 = vst [vmem:[#allocation2 + $0x38] sm:$0xff] %v622
        %v633 = vld [vmem:[#allocation9] sm:$0xff]
        %v634 = vld [vmem:[#allocation9 + $0x8] sm:$0xff]
        %v635 = vld [vmem:[#allocation9 + $0x10] sm:$0xff]
        %v636 = vld [vmem:[#allocation9 + $0x18] sm:$0xff]
        %v637 = vld [vmem:[#allocation9 + $0x20] sm:$0xff]
        %v638 = vld [vmem:[#allocation9 + $0x28] sm:$0xff]
        %v639 = vld [vmem:[#allocation9 + $0x30] sm:$0xff]
        %v640 = vld [vmem:[#allocation9 + $0x38] sm:$0xff]
        %v641 = vld [vmem:[#allocation9 + $0x40] sm:$0xff]
        %v642 = vld [vmem:[#allocation9 + $0x48] sm:$0xff]
        %v643 = vld [vmem:[#allocation9 + $0x50] sm:$0xff]
        %v644 = vld [vmem:[#allocation9 + $0x58] sm:$0xff]
        %v645 = vld [vmem:[#allocation9 + $0x60] sm:$0xff]
        %v646 = vld [vmem:[#allocation9 + $0x68] sm:$0xff]
        %v647 = vld [vmem:[#allocation9 + $0x70] sm:$0xff]
        %v648 = vld [vmem:[#allocation9 + $0x78] sm:$0xff]
        %v649 = vld [vmem:[%s7] sm:$0x1]
        %v651 = vlaneseq
        %v652 = vshrl.u32 %v651, 7
        %v653 = vsub.s32 0, %v652
        %v654 = vrot.slane %v649, %v653
        %v656 = vld [vmem:[#allocation3] sm:$0xff]
        %vm657 = vcmask 523264
        %v659 = vsel %vm657, %v656, 0
        %661 = vmatprep.subr.mxu0 %v634
        %662 = vmatpush1.msra.mxu0 %v633
        %663 = vmatprep.subr.mxu0 %v636
        %664 = vmatpush1.msra.mxu0 %v635
        %665 = vmatprep.subr.mxu0 %v638
        %666 = vmatpush1.msra.mxu0 %v637
        %667 = vmatprep.subr.mxu0 %v640
        %668 = vmatpush1.msra.mxu0 %v639
        %669 = vmatprep.subr.mxu0 %v642
        %670 = vmatpush1.msra.mxu0 %v641
        %671 = vmatprep.subr.mxu0 %v644
        %672 = vmatpush1.msra.mxu0 %v643
        %673 = vmatprep.subr.mxu0 %v646
        %674 = vmatpush1.msra.mxu0 %v645
        %675 = vmatprep.subr.mxu0 %v648
        %676 = vmatpush1.msra.mxu0 %v647
        %677 = vmatprep.subr.mxu0 0.0
        %678 = vmatpush1.msra.mxu0 0.0
        %679 = vmatprep.subr.mxu0 0.0
        %680 = vmatpush1.msra.mxu0 0.0
        %681 = vmatprep.subr.mxu0 0.0
        %682 = vmatpush1.msra.mxu0 0.0
        %683 = vmatprep.subr.mxu0 0.0
        %684 = vmatpush1.msra.mxu0 0.0
        %685 = vmatprep.subr.mxu0 0.0
        %686 = vmatpush1.msra.mxu0 0.0
        %687 = vmatprep.subr.mxu0 0.0
        %688 = vmatpush1.msra.mxu0 0.0
        %689 = vmatprep.subr.mxu0 0.0
        %690 = vmatpush1.msra.mxu0 0.0
        %691 = vmatprep.subr.mxu0 0.0
        %692 = vmatpush1.msra.mxu0 0.0
        %693 = vmatprep.subr.mxu0 0.0
        %694 = vmatpush1.msra.mxu0 0.0
        %695 = vmatprep.subr.mxu0 0.0
        %696 = vmatpush1.msra.mxu0 0.0
        %697 = vmatprep.subr.mxu0 0.0
        %698 = vmatpush1.msra.mxu0 0.0
        %699 = vmatprep.subr.mxu0 0.0
        %700 = vmatpush1.msra.mxu0 0.0
        %701 = vmatprep.subr.mxu0 0.0
        %702 = vmatpush1.msra.mxu0 0.0
        %703 = vmatprep.subr.mxu0 0.0
        %704 = vmatpush1.msra.mxu0 0.0
        %705 = vmatprep.subr.mxu0 0.0
        %706 = vmatpush1.msra.mxu0 0.0
        %707 = vmatprep.subr.mxu0 0.0
        %708 = vmatpush1.msra.mxu0 0.0
        %709 = vmatprep.subr.mxu0 0.0
        %710 = vmatpush1.msra.mxu0 0.0
        %711 = vmatprep.subr.mxu0 0.0
        %712 = vmatpush1.msra.mxu0 0.0
        %713 = vmatprep.subr.mxu0 0.0
        %714 = vmatpush1.msra.mxu0 0.0
        %715 = vmatprep.subr.mxu0 0.0
        %716 = vmatpush1.msra.mxu0 0.0
        %717 = vmatprep.subr.mxu0 0.0
        %718 = vmatpush1.msra.mxu0 0.0
        %719 = vmatprep.subr.mxu0 0.0
        %720 = vmatpush1.msra.mxu0 0.0
        %721 = vmatprep.subr.mxu0 0.0
        %722 = vmatpush1.msra.mxu0 0.0
        %723 = vmatprep.subr.mxu0 0.0
        %724 = vmatpush1.msra.mxu0 0.0
        %725 = vmatprep.mubr.f32.mxu0 0.0
        %726 = vmatmul.mubr.f32.gmra.mrb[0].mxu0 %v659
        %v727 = vpop.f32.mrb[0].mxu0
        %v728 = vadd.f32 0.0, %v727
        %v729 = vpop.f32.mrb[0].mxu0
        %730 = vdwg.mxu0
        %v731 = vld [vmem:[#allocation2] sm:$0xff]
        %v732 = vadd.f32 %v731, %v728
        %v733 = vld [vmem:[#allocation4] sm:$0xff]
        %v734 = vxor.u32 %v732, 2147483648
        %v735 = vmul.f32 %v734, 1.442695
        %v736 = vpow.pop %v735
        %v737 = vadd.f32 %v736, 1.0
        %v738 = vrcp.pop %v737
        %v739 = vmul.f32 1.0, %v738
        %v740 = vtanh.pop %v732
        %742 = vrot.lane.b32.xlu0 %v733, 32
        %v743 = vpop.permute.xlu0 %742
        %v745 = vmul.f32 %v739, %v743
        %747 = vrot.lane.b32.xlu0 %v740, 64
        %v748 = vpop.permute.xlu0 %747
        %v750 = vmul.f32 %v739, %v748
        %752 = vrot.lane.b32.xlu0 %v750, 32
        %v753 = vpop.permute.xlu0 %752
        %v755 = vadd.f32 %v745, %v753
        %v756 = vtanh.pop %v755
        %758 = vrot.lane.b32.xlu0 %v756, 64
        %v759 = vpop.permute.xlu0 %758
        %v761 = vmul.f32 %v739, %v759
        %763 = vrot.lane.b32.xlu0 %v761, 32
        %v764 = vpop.permute.xlu0 %763
        %766 = vst.msk [vmem:[#allocation3] sm:$0xff] %vm396, %v764
        %768 = vrot.lane.b32.xlu0 %v755, 96
        %v769 = vpop.permute.xlu0 %768
        %771 = vst.msk [vmem:[#allocation4] sm:$0xff] %vm396, %v769
        loop: start=0, step=1, limit=7
        $region65: #{tpu_custom_call.1} parent=51 // loop_pre_header
          _
        $region66: #{tpu_custom_call.1} parent=51 // loop_header
          %s773 = sphi 0, %s777
          %p774 = scmp.ge.s32.totalorder %s773, 7
        $region67: #{tpu_custom_call.1} parent=51 // loop_header_branch
          %776 = sbr.rel (%p774) target = $region71
        $region68: #{tpu_custom_call.1} parent=51 // loop_body
          %v778 = vld [vmem:[#allocation3] sm:$0xff]
          %v780 = vsel %vm657, %v778, 0
          %782 = vmatprep.subr.mxu0 %v634
          %783 = vmatpush1.msra.mxu0 %v633
          %784 = vmatprep.subr.mxu0 %v636
          %785 = vmatpush1.msra.mxu0 %v635
          %786 = vmatprep.subr.mxu0 %v638
          %787 = vmatpush1.msra.mxu0 %v637
          %788 = vmatprep.subr.mxu0 %v640
          %789 = vmatpush1.msra.mxu0 %v639
          %790 = vmatprep.subr.mxu0 %v642
          %791 = vmatpush1.msra.mxu0 %v641
          %792 = vmatprep.subr.mxu0 %v644
          %793 = vmatpush1.msra.mxu0 %v643
          %794 = vmatprep.subr.mxu0 %v646
          %795 = vmatpush1.msra.mxu0 %v645
          %796 = vmatprep.subr.mxu0 %v648
          %797 = vmatpush1.msra.mxu0 %v647
          %798 = vmatprep.subr.mxu0 0.0
          %799 = vmatpush1.msra.mxu0 0.0
          %800 = vmatprep.subr.mxu0 0.0
          %801 = vmatpush1.msra.mxu0 0.0
          %802 = vmatprep.subr.mxu0 0.0
          %803 = vmatpush1.msra.mxu0 0.0
          %804 = vmatprep.subr.mxu0 0.0
          %805 = vmatpush1.msra.mxu0 0.0
          %806 = vmatprep.subr.mxu0 0.0
          %807 = vmatpush1.msra.mxu0 0.0
          %808 = vmatprep.subr.mxu0 0.0
          %809 = vmatpush1.msra.mxu0 0.0
          %810 = vmatprep.subr.mxu0 0.0
          %811 = vmatpush1.msra.mxu0 0.0
          %812 = vmatprep.subr.mxu0 0.0
          %813 = vmatpush1.msra.mxu0 0.0
          %814 = vmatprep.subr.mxu0 0.0
          %815 = vmatpush1.msra.mxu0 0.0
          %816 = vmatprep.subr.mxu0 0.0
          %817 = vmatpush1.msra.mxu0 0.0
          %818 = vmatprep.subr.mxu0 0.0
          %819 = vmatpush1.msra.mxu0 0.0
          %820 = vmatprep.subr.mxu0 0.0
          %821 = vmatpush1.msra.mxu0 0.0
          %822 = vmatprep.subr.mxu0 0.0
          %823 = vmatpush1.msra.mxu0 0.0
          %824 = vmatprep.subr.mxu0 0.0
          %825 = vmatpush1.msra.mxu0 0.0
          %826 = vmatprep.subr.mxu0 0.0
          %827 = vmatpush1.msra.mxu0 0.0
          %828 = vmatprep.subr.mxu0 0.0
          %829 = vmatpush1.msra.mxu0 0.0
          %830 = vmatprep.subr.mxu0 0.0
          %831 = vmatpush1.msra.mxu0 0.0
          %832 = vmatprep.subr.mxu0 0.0
          %833 = vmatpush1.msra.mxu0 0.0
          %834 = vmatprep.subr.mxu0 0.0
          %835 = vmatpush1.msra.mxu0 0.0
          %836 = vmatprep.subr.mxu0 0.0
          %837 = vmatpush1.msra.mxu0 0.0
          %838 = vmatprep.subr.mxu0 0.0
          %839 = vmatpush1.msra.mxu0 0.0
          %840 = vmatprep.subr.mxu0 0.0
          %841 = vmatpush1.msra.mxu0 0.0
          %842 = vmatprep.subr.mxu0 0.0
          %843 = vmatpush1.msra.mxu0 0.0
          %844 = vmatprep.subr.mxu0 0.0
          %845 = vmatpush1.msra.mxu0 0.0
          %846 = vmatprep.mubr.f32.mxu0 0.0
          %847 = vmatmul.mubr.f32.gmra.mrb[0].mxu0 %v780
          %v848 = vpop.f32.mrb[0].mxu0
          %v849 = vadd.f32 0.0, %v848
          %v850 = vpop.f32.mrb[0].mxu0
          %v851 = vadd.f32 0.0, %v850
          %852 = vdwg.mxu0
          %v853 = vadd.f32 %v851, %v654
          %s854 = sadd.s32 %s773, 1
          %s855 = smul.u32 %s854, 8
          %s856 = scalar_lea.vmem [#allocation2], %s855
          %v857 = vld [vmem:[%s856] sm:$0xff]
          %v858 = vadd.f32 %v857, %v849
          %v859 = vld [vmem:[#allocation5] sm:$0xff]
          %v860 = vxor.u32 %v853, 2147483648
          %v861 = vmul.f32 %v860, 1.442695
          %v862 = vpow.pop %v861
          %v863 = vadd.f32 %v862, 1.0
          %v864 = vrcp.pop %v863
          %v865 = vmul.f32 1.0, %v864
          %v866 = vtanh.pop %v853
          %868 = vrot.lane.b32.xlu0 %v859, 32
          %v869 = vpop.permute.xlu0 %868
          %v871 = vmul.f32 %v865, %v869
          %873 = vrot.lane.b32.xlu0 %v866, 64
          %v874 = vpop.permute.xlu0 %873
          %v876 = vmul.f32 %v865, %v874
          %878 = vrot.lane.b32.xlu0 %v876, 32
          %v879 = vpop.permute.xlu0 %878
          %v881 = vadd.f32 %v871, %v879
          %v882 = vtanh.pop %v881
          %884 = vrot.lane.b32.xlu0 %v882, 64
          %v885 = vpop.permute.xlu0 %884
          %v887 = vmul.f32 %v865, %v885
          %v888 = vld [vmem:[#allocation4] sm:$0xff]
          %v889 = vxor.u32 %v858, 2147483648
          %v890 = vmul.f32 %v889, 1.442695
          %v891 = vpow.pop %v890
          %v892 = vadd.f32 %v891, 1.0
          %v893 = vrcp.pop %v892
          %v894 = vmul.f32 1.0, %v893
          %v895 = vtanh.pop %v858
          %897 = vrot.lane.b32.xlu0 %v888, 32
          %v898 = vpop.permute.xlu0 %897
          %v900 = vmul.f32 %v894, %v898
          %902 = vrot.lane.b32.xlu0 %v895, 64
          %v903 = vpop.permute.xlu0 %902
          %v905 = vmul.f32 %v894, %v903
          %907 = vrot.lane.b32.xlu0 %v905, 32
          %v908 = vpop.permute.xlu0 %907
          %v910 = vadd.f32 %v900, %v908
          %v911 = vtanh.pop %v910
          %913 = vrot.lane.b32.xlu0 %v911, 64
          %v914 = vpop.permute.xlu0 %913
          %v916 = vmul.f32 %v894, %v914
          %918 = vrot.lane.b32.xlu0 %v887, 32
          %v919 = vpop.permute.xlu0 %918
          %s921 = smul.u32 %s773, 8
          %s922 = scalar_lea.vmem %s368, %s921 [#allocation11]
          %923 = vst.msk [vmem:[%s922] sm:$0xff] %vm396, %v919
          %924 = vrot.lane.b32.xlu0 %v887, 64
          %v925 = vpop.permute.xlu0 %924
          %vm927 = vcmask 523520
          %928 = vst.msk [vmem:[#allocation3] sm:$0xff] %vm927, %v925
          %930 = vrot.lane.b32.xlu0 %v881, 96
          %v931 = vpop.permute.xlu0 %930
          %933 = vst.msk [vmem:[#allocation5] sm:$0xff] %vm396, %v931
          %935 = vrot.lane.b32.xlu0 %v916, 32
          %v936 = vpop.permute.xlu0 %935
          %938 = vst.msk [vmem:[#allocation3] sm:$0xff] %vm396, %v936
          %940 = vrot.lane.b32.xlu0 %v910, 96
          %v941 = vpop.permute.xlu0 %940
          %943 = vst.msk [vmem:[#allocation4] sm:$0xff] %vm396, %v941
        $region69: #{tpu_custom_call.1} parent=51 // loop_footer
          %s777 = sadd.s32 1, %s773
        $region70: #{tpu_custom_call.1} parent=51 // loop_footer_branch
          %772 = sbr.rel target = $region66
        $region71: #{tpu_custom_call.1} parent=51 // loop_exit
          _
        %v944 = vld [vmem:[#allocation3] sm:$0xff]
        %v946 = vsel %vm657, %v944, 0
        %948 = vmatprep.subr.mxu0 %v634
        %949 = vmatpush1.msra.mxu0 %v633
        %950 = vmatprep.subr.mxu0 %v636
        %951 = vmatpush1.msra.mxu0 %v635
        %952 = vmatprep.subr.mxu0 %v638
        %953 = vmatpush1.msra.mxu0 %v637
        %954 = vmatprep.subr.mxu0 %v640
        %955 = vmatpush1.msra.mxu0 %v639
        %956 = vmatprep.subr.mxu0 %v642
        %957 = vmatpush1.msra.mxu0 %v641
        %958 = vmatprep.subr.mxu0 %v644
        %959 = vmatpush1.msra.mxu0 %v643
        %960 = vmatprep.subr.mxu0 %v646
        %961 = vmatpush1.msra.mxu0 %v645
        %962 = vmatprep.subr.mxu0 %v648
        %963 = vmatpush1.msra.mxu0 %v647
        %964 = vmatprep.subr.mxu0 0.0
        %965 = vmatpush1.msra.mxu0 0.0
        %966 = vmatprep.subr.mxu0 0.0
        %967 = vmatpush1.msra.mxu0 0.0
        %968 = vmatprep.subr.mxu0 0.0
        %969 = vmatpush1.msra.mxu0 0.0
        %970 = vmatprep.subr.mxu0 0.0
        %971 = vmatpush1.msra.mxu0 0.0
        %972 = vmatprep.subr.mxu0 0.0
        %973 = vmatpush1.msra.mxu0 0.0
        %974 = vmatprep.subr.mxu0 0.0
        %975 = vmatpush1.msra.mxu0 0.0
        %976 = vmatprep.subr.mxu0 0.0
        %977 = vmatpush1.msra.mxu0 0.0
        %978 = vmatprep.subr.mxu0 0.0
        %979 = vmatpush1.msra.mxu0 0.0
        %980 = vmatprep.subr.mxu0 0.0
        %981 = vmatpush1.msra.mxu0 0.0
        %982 = vmatprep.subr.mxu0 0.0
        %983 = vmatpush1.msra.mxu0 0.0
        %984 = vmatprep.subr.mxu0 0.0
        %985 = vmatpush1.msra.mxu0 0.0
        %986 = vmatprep.subr.mxu0 0.0
        %987 = vmatpush1.msra.mxu0 0.0
        %988 = vmatprep.subr.mxu0 0.0
        %989 = vmatpush1.msra.mxu0 0.0
        %990 = vmatprep.subr.mxu0 0.0
        %991 = vmatpush1.msra.mxu0 0.0
        %992 = vmatprep.subr.mxu0 0.0
        %993 = vmatpush1.msra.mxu0 0.0
        %994 = vmatprep.subr.mxu0 0.0
        %995 = vmatpush1.msra.mxu0 0.0
        %996 = vmatprep.subr.mxu0 0.0
        %997 = vmatpush1.msra.mxu0 0.0
        %998 = vmatprep.subr.mxu0 0.0
        %999 = vmatpush1.msra.mxu0 0.0
        %1000 = vmatprep.subr.mxu0 0.0
        %1001 = vmatpush1.msra.mxu0 0.0
        %1002 = vmatprep.subr.mxu0 0.0
        %1003 = vmatpush1.msra.mxu0 0.0
        %1004 = vmatprep.subr.mxu0 0.0
        %1005 = vmatpush1.msra.mxu0 0.0
        %1006 = vmatprep.subr.mxu0 0.0
        %1007 = vmatpush1.msra.mxu0 0.0
        %1008 = vmatprep.subr.mxu0 0.0
        %1009 = vmatpush1.msra.mxu0 0.0
        %1010 = vmatprep.subr.mxu0 0.0
        %1011 = vmatpush1.msra.mxu0 0.0
        %1012 = vmatprep.mubr.f32.mxu0 0.0
        %1013 = vmatmul.mubr.f32.gmra.mrb[0].mxu0 %v946
        %v1014 = vpop.f32.mrb[0].mxu0
        %v1015 = vpop.f32.mrb[0].mxu0
        %v1016 = vadd.f32 0.0, %v1015
        %1017 = vdwg.mxu0
        %v1018 = vadd.f32 %v1016, %v654
        %v1019 = vld [vmem:[#allocation5] sm:$0xff]
        %v1020 = vxor.u32 %v1018, 2147483648
        %v1021 = vmul.f32 %v1020, 1.442695
        %v1022 = vpow.pop %v1021
        %v1023 = vadd.f32 %v1022, 1.0
        %v1024 = vrcp.pop %v1023
        %v1025 = vmul.f32 1.0, %v1024
        %v1026 = vtanh.pop %v1018
        %1028 = vrot.lane.b32.xlu0 %v1019, 32
        %v1029 = vpop.permute.xlu0 %1028
        %v1031 = vmul.f32 %v1025, %v1029
        %1033 = vrot.lane.b32.xlu0 %v1026, 64
        %v1034 = vpop.permute.xlu0 %1033
        %v1036 = vmul.f32 %v1025, %v1034
        %1038 = vrot.lane.b32.xlu0 %v1036, 32
        %v1039 = vpop.permute.xlu0 %1038
        %v1041 = vadd.f32 %v1031, %v1039
        %v1042 = vtanh.pop %v1041
        %1044 = vrot.lane.b32.xlu0 %v1042, 64
        %v1045 = vpop.permute.xlu0 %1044
        %v1047 = vmul.f32 %v1025, %v1045
        %1049 = vrot.lane.b32.xlu0 %v1047, 32
        %v1050 = vpop.permute.xlu0 %1049
        %s1052 = scalar_lea.vmem %s368, 56 [#allocation11]
        %1053 = vst.msk [vmem:[%s1052] sm:$0xff] %vm396, %v1050
        %1054 = vrot.lane.b32.xlu0 %v1047, 64
        %v1055 = vpop.permute.xlu0 %1054
        %vm1057 = vcmask 523520
        %1058 = vst.msk [vmem:[#allocation3] sm:$0xff] %vm1057, %v1055
        %1060 = vrot.lane.b32.xlu0 %v1041, 96
        %v1061 = vpop.permute.xlu0 %1060
        %1063 = vst.msk [vmem:[#allocation5] sm:$0xff] %vm396, %v1061
        %s1064 = sand.u32 %s228, 1
        %s1065 = scalar_lea.sflag [#allocation8], %s1064
        %s1066 = sand.u32 %s228, 1
        %s1067 = smul.addr %s1066, 64
        %s1068 = scalar_lea.vmem [#allocation11], %s1067
        // Predicated region
        $region72: #{tpu_custom_call.1} parent=51 // pred_check
          %p1069 = pneg %p238
        $region73: #{tpu_custom_call.1} parent=51 // pred_check_branch
          %1071 = sbr.rel (%p1069) target = $region75
        $region74: #{tpu_custom_call.1} parent=51 // pred_region
          %s1072 = smul.u32 8, %s31
          %s1074 = ssub.s32 1024, 1024
          %1075 = vsyncadd %s1065, %s1074
          %s1076 = sadd.s32 %s30, %s1072
          %s1077 = smul.addr %s1076, 128
          %s1078 = scalar_lea.hbm %s8, %s1077
          %s1079 = sshll.u32 %s1068, 4
          %s1080 = int_to_ptr.vmem [resolvable:$true] %s1079
          %1085 = dma.vmem_to_hbm [thread:$0]  %s1080, 1024, %s1078, %s1065, 128, 128, 8
        $region75: #{tpu_custom_call.1} parent=51 // pred_fallthru
          _
      $region52: #{tpu_custom_call.1} parent=5 // pred_fallthru
        _
      %p1086 = scmp.le.s32.totalorder 2, %s21
      // Predicated region
      $region76: #{tpu_custom_call.1} parent=5 // pred_check
        %p1087 = pneg %p1086
      $region77: #{tpu_custom_call.1} parent=5 // pred_check_branch
        %1089 = sbr.rel (%p1087) target = $region79
      $region78: #{tpu_custom_call.1} parent=5 // pred_region
        %s1090 = ssub.s32 %s21, 2
        // Predicated region
        $region80: #{tpu_custom_call.1} parent=78 // pred_check
          %p1091 = pneg %p244
        $region81: #{tpu_custom_call.1} parent=78 // pred_check_branch
          %1093 = sbr.rel (%p1091) target = $region83
        $region82: #{tpu_custom_call.1} parent=78 // pred_region
          %s1094 = sand.u32 %s229, 1
          %s1095 = scalar_lea.sflag [#allocation8], %s1094
          %s1096 = sand.u32 %s229, 1
          %s1097 = smul.addr %s1096, 64
          %s1098 = scalar_lea.vmem [#allocation11], %s1097
          %1099 = dma.done %s1095, 1024
        $region83: #{tpu_custom_call.1} parent=78 // pred_fallthru
          _
      $region79: #{tpu_custom_call.1} parent=5 // pred_fallthru
        _
    $region6: #{tpu_custom_call.1} parent=1 // loop_footer
      %s25 = sadd.s32 1, %s21
    $region7: #{tpu_custom_call.1} parent=1 // loop_footer_branch
      %20 = sbr.rel target = $region3
    $region8: #{tpu_custom_call.1} parent=1 // loop_exit
      _
    %1100 = vsyncpa [#allocation7], 1
    %s1101 = scalar_lea.sflag [#allocation7], 1
    %1102 = vsyncpa %s1101, 1
    %1103 = vsyncpa [#allocation10], 1
    %1104 = vsyncpa [#allocation8], 1
    %s1105 = scalar_lea.sflag [#allocation8], 1
    %1106 = vsyncpa %s1105, 1

</llo_original>
